<compile_context>
chip_gen: v6e
topology: v6e:2x2x1
jax: 0.10.0
libtpu: 0.0.40
codegen_flags: <defaults>
</compile_context>

<pallas_src>
import math
import functools

import jax
import jax.numpy as jnp
from jax import lax
from jax.experimental import pallas as pl
from jax.experimental.pallas import tpu as pltpu

LN_EPS = 1e-5  # torch.nn.LayerNorm default


def _layernorm(x, gamma, beta):
    mean = jnp.mean(x, axis=-1, keepdims=True)
    var = jnp.mean((x - mean) ** 2, axis=-1, keepdims=True)
    return (x - mean) * lax.rsqrt(var + LN_EPS) * gamma + beta


# ----------------------------------------------------------------------------
# Fused two-pass kernel
# ----------------------------------------------------------------------------
def block_kernel(fx_ref, g1_ref, be1_ref, wx_ref, bx_ref, wsl_ref, bsl_ref,
                 r_ref, mask_ref, wo_ref, bo_ref, g2_ref, be2_ref,
                 w1_ref, b1_ref, w2_ref, b2_ref,
                 out_ref,
                 m_s, l_s, eid_s,
                 *, num_heads, dim_head, slice_num, base_temp, log_neg_log_eps):
    H, Dh, G = num_heads, dim_head, slice_num
    HG = H * G
    p = pl.program_id(1)            # 0 = stats pass, 1 = apply pass
    t = pl.program_id(2)            # N-tile index
    nt = pl.num_programs(2)

    # ---- shared per-tile prologue (identical in both passes) --------------
    x = fx_ref[0]                                               # (Nt, C) f32
    xn = _layernorm(x, g1_ref[...], be1_ref[...])               # ln_1, f32

    # in_project_x for all heads at once (bf16 MXU operands, f32 accumulate)
    xp = jnp.dot(xn.astype(jnp.bfloat16), wx_ref[...],
                 preferred_element_type=jnp.float32) + bx_ref[...]      # (Nt, H*Dh)

    # ONE fused matmul: [Rep-Slice logits | Ada-Temp] -> (Nt, H*G + H)
    fused = jnp.dot(xp.astype(jnp.bfloat16), wsl_ref[...],
                    preferred_element_type=jnp.float32) + bsl_ref[...]
    logits = fused[:, :HG]                                      # (Nt, H*G)
    t_raw = fused[:, HG:]                                       # (Nt, H)

    temp = base_temp + jnp.clip(t_raw, -0.4, 0.4)               # Ada-Temp
    inv_temp = pl.reciprocal(temp, approx=True)                 # EUP slot
    # broadcast per-head 1/temp to all G slice columns via a 0/1 matmul
    inv_rep = jnp.dot(inv_temp, r_ref[...],
                      preferred_element_type=jnp.float32)       # (Nt, H*G)
    scaled = (logits - log_neg_log_eps) * inv_rep               # (Nt, H*G)

    # ---- pass 0: online softmax stats + eidetic-state numerator -----------
    @pl.when(jnp.logical_and(p == 0, t == 0))
    def _init():
        m_s[...] = jnp.full_like(m_s, -jnp.inf)
        l_s[...] = jnp.zeros_like(l_s)
        eid_s[...] = jnp.zeros_like(eid_s)

    @pl.when(p == 0)
    def _stats():
        m_old = m_s[...]                                        # (1, H*G)
        m_new = jnp.maximum(m_old, jnp.max(scaled, axis=0, keepdims=True))
        alpha = jnp.exp(m_old - m_new)                          # (1, H*G)
        e = jnp.exp(scaled - m_new)                             # (Nt, H*G)
        l_s[...] = alpha * l_s[...] + jnp.sum(e, axis=0, keepdims=True)
        # head-batched numerator (all heads in one matmul, contraction over N):
        #   eid_s[d_col, g_col] += sum_n xp[n, d_col] * e[n, g_col]
        eid_s[...] = eid_s[...] * alpha + lax.dot_general(
            xp.astype(jnp.bfloat16), e.astype(jnp.bfloat16),
            (((0,), (0,)), ((), ())), preferred_element_type=jnp.float32)
        m_s[...] = m_new

        @pl.when(t == nt - 1)
        def _finalize():
            # softmax denominator; slice_norm = sum_n softmax = l / l = 1
            scale = 1.0 / (l_s[...] * (1.0 + 1e-5))             # exact, (1, H*G)
            # normalize + zero cross-head blocks; states stay resident in VMEM
            eid_s[...] = eid_s[...] * scale * mask_ref[...]
            # TODO(synk): ErwinTransformer (hierarchical ball-tree attention) on
            # the eidetic states is an external module whose source is not
            # provided; applied as identity here.

    # ---- pass 1: apply slice weights, to_out, ln_2, MLP, residuals ---------
    @pl.when(p == 1)
    def _apply():
        inv_l = 1.0 / l_s[...]                                  # exact reciprocal
        sw = jnp.exp(scaled - m_s[...]) * inv_l                 # slice weights (Nt, H*G)
        # de-slice all heads with one lane-dense matmul against masked states
        att = lax.dot_general(sw.astype(jnp.bfloat16),
                              eid_s[...].astype(jnp.bfloat16),
                              (((1,), (1,)), ((), ())),
                              preferred_element_type=jnp.float32)   # (Nt, H*Dh)
        # to_out (Dropout p=0 -> identity) + residual with un-normalized input
        y = jnp.dot(att.astype(jnp.bfloat16), wo_ref[...],
                    preferred_element_type=jnp.float32) + bo_ref[...] + x
        # ln_2 + MLP (linear_pre -> GELU -> linear_post; n_layers=0) + residual
        z = _layernorm(y, g2_ref[...], be2_ref[...])
        hdn = jnp.dot(z.astype(jnp.bfloat16), w1_ref[...],
                      preferred_element_type=jnp.float32) + b1_ref[...]
        # TODO(synk): nn.GELU default is exact erf; tanh-approximate GELU is used
        # in-kernel (guaranteed Mosaic lowering, <~1e-3 max deviation).
        hdn = jax.nn.gelu(hdn, approximate=True)
        o = jnp.dot(hdn.astype(jnp.bfloat16), w2_ref[...],
                    preferred_element_type=jnp.float32) + b2_ref[...]
        out_ref[0] = (o + y).astype(out_ref.dtype)


# ----------------------------------------------------------------------------
# Wrapper
# ----------------------------------------------------------------------------
def transolver_block(fx, params, *, num_heads, dim_head, slice_num, mlp_ratio,
                     base_temp=0.5, epsilon=1e-6, n_tile=None):
    B, N, C = fx.shape
    H, Dh, G = num_heads, dim_head, slice_num
    inner = H * Dh
    HG = H * G
    M = C * mlp_ratio
    lnle = math.log(-math.log(epsilon))

    if n_tile is None:
        n_tile = min(N, 1024)
    assert N % n_tile == 0 and (n_tile % 8 == 0 or n_tile == N), \
        "n_tile must divide N and be a multiple of 8"
    nt = N // n_tile

    f32, bf16 = jnp.float32, jnp.bfloat16

    # Per-head weights laid out block-diagonally; Rep-Slice and Ada-Temp fused
    # into ONE lane-dense projection of width H*G + H.
    Ws_bd = jax.scipy.linalg.block_diag(*([params["Ws"]] * H))        # (inner, H*G)
    Wt_bd = jax.scipy.linalg.block_diag(*([params["Wt"]] * H))        # (inner, H)
    Wsl = jnp.concatenate([Ws_bd, Wt_bd], axis=1).astype(bf16)        # (inner, H*G+H)
    bsl = jnp.concatenate([jnp.tile(params["bs"], (1, H)),
                           jnp.tile(params["bt"], (1, H))], axis=1).astype(f32)
    R = jnp.repeat(jnp.eye(H, dtype=f32), G, axis=1)                  # (H, H*G)
    # block-diagonal head mask for the (H*Dh, H*G) eidetic-state layout
    maskT = jnp.kron(jnp.eye(H, dtype=f32), jnp.ones((Dh, G), f32))   # (inner, H*G)

    kernel = functools.partial(
        block_kernel, num_heads=H, dim_head=Dh, slice_num=G,
        base_temp=base_temp, log_neg_log_eps=lnle)

    def wspec(shape):
        return pl.BlockSpec(shape, lambda b, p, t: (0, 0))

    return pl.pallas_call(
        kernel,
        out_shape=jax.ShapeDtypeStruct((B, N, C), jnp.float32),
        grid_spec=pltpu.PrefetchScalarGridSpec(
            num_scalar_prefetch=0,
            grid=(B, 2, nt),            # batch x {stats, apply} x N tiles
            in_specs=[
                pl.BlockSpec((1, n_tile, C), lambda b, p, t: (b, t, 0)),   # fx
                wspec((1, C)), wspec((1, C)),                  # ln_1 gamma/beta
                wspec((C, inner)), wspec((1, inner)),          # in_project_x
                wspec((inner, HG + H)), wspec((1, HG + H)),    # fused slice+temp
                wspec((H, HG)),                                # head->slice 0/1 map
                wspec((inner, HG)),                            # head block mask
                wspec((inner, C)), wspec((1, C)),              # to_out
                wspec((1, C)), wspec((1, C)),                  # ln_2 gamma/beta
                wspec((C, M)), wspec((1, M)),                  # mlp.linear_pre
                wspec((M, C)), wspec((1, C)),                  # mlp.linear_post
            ],
            out_specs=pl.BlockSpec((1, n_tile, C), lambda b, p, t: (b, t, 0)),
            scratch_shapes=[
                pltpu.VMEM((1, HG), jnp.float32),        # running max
                pltpu.VMEM((1, HG), jnp.float32),        # running sum-exp
                pltpu.VMEM((inner, HG), jnp.float32),    # eidetic states (d, g)
            ]),
        compiler_params=pltpu.CompilerParams(
            dimension_semantics=("parallel", "arbitrary", "arbitrary"),
            vmem_limit_bytes=48 * 1024 * 1024),
    )(fx, params["g1"], params["be1"],
      params["Wx"].astype(bf16), params["bx"],
      Wsl, bsl, R, maskT,
      params["Wo"].astype(bf16), params["bo"],
      params["g2"], params["be2"],
      params["W1"].astype(bf16), params["b1"],
      params["W2"].astype(bf16), params["b2"])


# ----------------------------------------------------------------------------
# Pure-JAX reference (mirrors the PyTorch forward in f32; Erwin as identity)
# ----------------------------------------------------------------------------
def transolver_block_ref(fx, params, *, num_heads, dim_head, slice_num, mlp_ratio,
                         base_temp=0.5, epsilon=1e-6):
    B, N, C = fx.shape
    H, Dh, G = num_heads, dim_head, slice_num
    lnle = math.log(-math.log(epsilon))

    def ln(x, g, b):
        mu = jnp.mean(x, axis=-1, keepdims=True)
        v = jnp.mean((x - mu) ** 2, axis=-1, keepdims=True)
        return (x - mu) / jnp.sqrt(v + LN_EPS) * g + b

    xn = ln(fx, params["g1"], params["be1"])
    xp = (xn @ params["Wx"] + params["bx"]).reshape(B, N, H, Dh).transpose(0, 2, 1, 3)
    temp = base_temp + jnp.clip(xp @ params["Wt"] + params["bt"], -0.4, 0.4)
    logits = xp @ params["Ws"] + params["bs"] - lnle
    sw = jax.nn.softmax(logits / temp, axis=2)                  # softmax over points
    norm = jnp.sum(sw, axis=2, keepdims=True)                   # (B,H,1,G)
    eid = jnp.einsum('bhnd,bhng->bhgd', xp, sw)
    eid = eid / (jnp.swapaxes(norm, -1, -2) + 1e-5)
    out = jnp.einsum('bhgd,bhng->bhnd', eid, sw)
    out = out.transpose(0, 2, 1, 3).reshape(B, N, H * Dh)
    y = out @ params["Wo"] + params["bo"] + fx
    z = ln(y, params["g2"], params["be2"])
    hid = jax.nn.gelu(z @ params["W1"] + params["b1"], approximate=False)
    return hid @ params["W2"] + params["b2"] + y


# ----------------------------------------------------------------------------
# Deterministic parameter construction (synthetic; shapes from the module init)
# ----------------------------------------------------------------------------
def init_params(key, C, H, Dh, G, mlp_ratio):
    inner = H * Dh
    M = C * mlp_ratio
    ks = jax.random.split(key, 6)

    def lin(k, fan_in, shape):
        return jax.random.normal(k, shape, jnp.float32) / math.sqrt(fan_in)

    return dict(
        g1=jnp.ones((1, C), jnp.float32), be1=jnp.zeros((1, C), jnp.float32),
        Wx=lin(ks[0], C, (C, inner)),                 # in_project_x (cols head-major)
        bx=jnp.zeros((1, inner), jnp.float32),
        Ws=lin(ks[1], Dh, (Dh, G)),                   # in_project_slice (shared/head)
        bs=jnp.zeros((1, G), jnp.float32),
        Wt=lin(ks[2], Dh, (Dh, 1)),                   # ada_temp_linear
        bt=jnp.zeros((1, 1), jnp.float32),
        Wo=lin(ks[3], inner, (inner, C)),             # to_out
        bo=jnp.zeros((1, C), jnp.float32),
        g2=jnp.ones((1, C), jnp.float32), be2=jnp.zeros((1, C), jnp.float32),
        W1=lin(ks[4], C, (C, M)), b1=jnp.zeros((1, M), jnp.float32),   # mlp.linear_pre
        W2=lin(ks[5], M, (M, C)), b2=jnp.zeros((1, C), jnp.float32),   # mlp.linear_post
    )


if __name__ == "__main__":
    # Small shapes consistent with the module: hidden_dim=32, num_heads=4,
    # dim_head=8, slice_num=16, mlp_ratio=4.  n_tile=32 exercises the two-pass
    # N tiling (2 tiles per batch).
    B, N, C = 2, 64, 32
    H = 4
    Dh = C // H
    G = 16
    mlp_ratio = 4

    key = jax.random.PRNGKey(0)
    k_x, k_p = jax.random.split(key)
    fx = jax.random.normal(k_x, (B, N, C), jnp.float32)
    params = init_params(k_p, C, H, Dh, G, mlp_ratio)

    out = transolver_block(fx, params, num_heads=H, dim_head=Dh,
                           slice_num=G, mlp_ratio=mlp_ratio, n_tile=32)
    out = jax.block_until_ready(out)
    assert out.shape == (B, N, C) and out.dtype == jnp.float32

    ref = transolver_block_ref(fx, params, num_heads=H, dim_head=Dh,
                               slice_num=G, mlp_ratio=mlp_ratio)
    ref = jax.block_until_ready(ref)
    # bf16 MXU operands + tanh-GELU vs the f32/erf reference: allow 1e-1 abs.
    max_err = float(jnp.max(jnp.abs(out - ref)))
    assert max_err < 1e-1, f"mismatch vs reference: {max_err}"

    print("KERNEL_OK")
</pallas_src>

<mosaic_0001>
module attributes {stable_mosaic.version = 11 : i64} {
  func.func @block_kernel(%arg0: i32, %arg1: i32, %arg2: i32, %arg3: memref<1x32x32xf32, #tpu.memory_space<vmem>>, %arg4: memref<1x32xf32, #tpu.memory_space<vmem>>, %arg5: memref<1x32xf32, #tpu.memory_space<vmem>>, %arg6: memref<32x32xbf16, #tpu.memory_space<vmem>>, %arg7: memref<1x32xf32, #tpu.memory_space<vmem>>, %arg8: memref<32x68xbf16, #tpu.memory_space<vmem>>, %arg9: memref<1x68xf32, #tpu.memory_space<vmem>>, %arg10: memref<4x64xf32, #tpu.memory_space<vmem>>, %arg11: memref<32x64xf32, #tpu.memory_space<vmem>>, %arg12: memref<32x32xbf16, #tpu.memory_space<vmem>>, %arg13: memref<1x32xf32, #tpu.memory_space<vmem>>, %arg14: memref<1x32xf32, #tpu.memory_space<vmem>>, %arg15: memref<1x32xf32, #tpu.memory_space<vmem>>, %arg16: memref<32x128xbf16, #tpu.memory_space<vmem>>, %arg17: memref<1x128xf32, #tpu.memory_space<vmem>>, %arg18: memref<128x32xbf16, #tpu.memory_space<vmem>>, %arg19: memref<1x32xf32, #tpu.memory_space<vmem>>, %arg20: memref<1x32x32xf32, #tpu.memory_space<vmem>>, %arg21: memref<1x64xf32, #tpu.memory_space<vmem>>, %arg22: memref<1x64xf32, #tpu.memory_space<vmem>>, %arg23: memref<32x64xf32, #tpu.memory_space<vmem>>) attributes {dimension_semantics = [#tpu.dimension_semantics<parallel>, #tpu.dimension_semantics<arbitrary>, #tpu.dimension_semantics<arbitrary>], iteration_bounds = array<i64: 2, 2, 2>, scalar_prefetch = 0 : i64, scratch_operands = 3 : i64, tpu.core_type = #tpu.core_type<tc>, window_params = [{transform_indices = @transform_0, window_bounds = array<i64: 1, 32, 32>}, {pipeline_mode = #tpu.pipeline_mode<synchronous>, transform_indices = @transform_1, window_bounds = array<i64: 1, 32>}, {pipeline_mode = #tpu.pipeline_mode<synchronous>, transform_indices = @transform_2, window_bounds = array<i64: 1, 32>}, {pipeline_mode = #tpu.pipeline_mode<synchronous>, transform_indices = @transform_3, window_bounds = array<i64: 32, 32>}, {pipeline_mode = #tpu.pipeline_mode<synchronous>, transform_indices = @transform_4, window_bounds = array<i64: 1, 32>}, {pipeline_mode = #tpu.pipeline_mode<synchronous>, transform_indices = @transform_5, window_bounds = array<i64: 32, 68>}, {pipeline_mode = #tpu.pipeline_mode<synchronous>, transform_indices = @transform_6, window_bounds = array<i64: 1, 68>}, {pipeline_mode = #tpu.pipeline_mode<synchronous>, transform_indices = @transform_7, window_bounds = array<i64: 4, 64>}, {pipeline_mode = #tpu.pipeline_mode<synchronous>, transform_indices = @transform_8, window_bounds = array<i64: 32, 64>}, {pipeline_mode = #tpu.pipeline_mode<synchronous>, transform_indices = @transform_9, window_bounds = array<i64: 32, 32>}, {pipeline_mode = #tpu.pipeline_mode<synchronous>, transform_indices = @transform_10, window_bounds = array<i64: 1, 32>}, {pipeline_mode = #tpu.pipeline_mode<synchronous>, transform_indices = @transform_11, window_bounds = array<i64: 1, 32>}, {pipeline_mode = #tpu.pipeline_mode<synchronous>, transform_indices = @transform_12, window_bounds = array<i64: 1, 32>}, {pipeline_mode = #tpu.pipeline_mode<synchronous>, transform_indices = @transform_13, window_bounds = array<i64: 32, 128>}, {pipeline_mode = #tpu.pipeline_mode<synchronous>, transform_indices = @transform_14, window_bounds = array<i64: 1, 128>}, {pipeline_mode = #tpu.pipeline_mode<synchronous>, transform_indices = @transform_15, window_bounds = array<i64: 128, 32>}, {pipeline_mode = #tpu.pipeline_mode<synchronous>, transform_indices = @transform_16, window_bounds = array<i64: 1, 32>}, {transform_indices = @transform_17, window_bounds = array<i64: 1, 32, 32>}]} {
    %c0 = arith.constant 0 : index
    %c0_0 = arith.constant 0 : index
    %c0_1 = arith.constant 0 : index
    %0 = vector.load %arg3[%c0, %c0_0, %c0_1] : memref<1x32x32xf32, #tpu.memory_space<vmem>>, vector<1x32x32xf32>
    %1 = vector.shape_cast %0 : vector<1x32x32xf32> to vector<32x32xf32>
    %c0_2 = arith.constant 0 : index
    %c0_3 = arith.constant 0 : index
    %2 = vector.load %arg4[%c0_2, %c0_3] : memref<1x32xf32, #tpu.memory_space<vmem>>, vector<1x32xf32>
    %c0_4 = arith.constant 0 : index
    %c0_5 = arith.constant 0 : index
    %3 = vector.load %arg5[%c0_4, %c0_5] : memref<1x32xf32, #tpu.memory_space<vmem>>, vector<1x32xf32>
    %cst = arith.constant dense<0.000000e+00> : vector<32xf32>
    %4 = vector.multi_reduction <add>, %1, %cst [1] : vector<32x32xf32> to vector<32xf32>
    %5 = vector.shape_cast %4 : vector<32xf32> to vector<32x1xf32>
    %cst_6 = arith.constant 3.200000e+01 : f32
    %6 = vector.broadcast %cst_6 : f32 to vector<32x1xf32>
    %7 = arith.divf %5, %6 : vector<32x1xf32>
    %8 = vector.broadcast %7 : vector<32x1xf32> to vector<32x32xf32>
    %9 = arith.subf %1, %8 : vector<32x32xf32>
    %10 = arith.mulf %9, %9 : vector<32x32xf32>
    %cst_7 = arith.constant dense<0.000000e+00> : vector<32xf32>
    %11 = vector.multi_reduction <add>, %10, %cst_7 [1] : vector<32x32xf32> to vector<32xf32>
    %12 = vector.shape_cast %11 : vector<32xf32> to vector<32x1xf32>
    %cst_8 = arith.constant 3.200000e+01 : f32
    %13 = vector.broadcast %cst_8 : f32 to vector<32x1xf32>
    %14 = arith.divf %12, %13 : vector<32x1xf32>
    %15 = vector.broadcast %7 : vector<32x1xf32> to vector<32x32xf32>
    %16 = arith.subf %1, %15 : vector<32x32xf32>
    %cst_9 = arith.constant 9.99999974E-6 : f32
    %17 = vector.broadcast %cst_9 : f32 to vector<32x1xf32>
    %18 = arith.addf %14, %17 : vector<32x1xf32>
    %19 = math.rsqrt %18 : vector<32x1xf32>
    %20 = vector.broadcast %19 : vector<32x1xf32> to vector<32x32xf32>
    %21 = arith.mulf %16, %20 : vector<32x32xf32>
    %22 = vector.broadcast %2 : vector<1x32xf32> to vector<32x32xf32>
    %23 = arith.mulf %21, %22 : vector<32x32xf32>
    %24 = vector.broadcast %3 : vector<1x32xf32> to vector<32x32xf32>
    %25 = arith.addf %23, %24 : vector<32x32xf32>
    %26 = arith.truncf %25 : vector<32x32xf32> to vector<32x32xbf16>
    %c0_10 = arith.constant 0 : index
    %c0_11 = arith.constant 0 : index
    %27 = vector.load %arg6[%c0_10, %c0_11] : memref<32x32xbf16, #tpu.memory_space<vmem>>, vector<32x32xbf16>
    %cst_12 = arith.constant dense<0.000000e+00> : vector<32x32xf32>
    %28 = tpu.matmul %26, %27, %cst_12 {dimension_numbers = #tpu.dot_dimension_numbers<[1], [0], [0], [1], [0, 0, 1, 1], [], []>} : vector<32x32xbf16>, vector<32x32xbf16>, vector<32x32xf32> -> vector<32x32xf32>
    %c0_13 = arith.constant 0 : index
    %c0_14 = arith.constant 0 : index
    %29 = vector.load %arg7[%c0_13, %c0_14] : memref<1x32xf32, #tpu.memory_space<vmem>>, vector<1x32xf32>
    %30 = vector.broadcast %29 : vector<1x32xf32> to vector<32x32xf32>
    %31 = arith.addf %28, %30 : vector<32x32xf32>
    %32 = arith.truncf %31 : vector<32x32xf32> to vector<32x32xbf16>
    %c0_15 = arith.constant 0 : index
    %c0_16 = arith.constant 0 : index
    %33 = vector.load %arg8[%c0_15, %c0_16] : memref<32x68xbf16, #tpu.memory_space<vmem>>, vector<32x68xbf16>
    %cst_17 = arith.constant dense<0.000000e+00> : vector<32x68xf32>
    %34 = tpu.matmul %32, %33, %cst_17 {dimension_numbers = #tpu.dot_dimension_numbers<[1], [0], [0], [1], [0, 0, 1, 1], [], []>} : vector<32x32xbf16>, vector<32x68xbf16>, vector<32x68xf32> -> vector<32x68xf32>
    %c0_18 = arith.constant 0 : index
    %c0_19 = arith.constant 0 : index
    %35 = vector.load %arg9[%c0_18, %c0_19] : memref<1x68xf32, #tpu.memory_space<vmem>>, vector<1x68xf32>
    %36 = vector.broadcast %35 : vector<1x68xf32> to vector<32x68xf32>
    %37 = arith.addf %34, %36 : vector<32x68xf32>
    %38 = vector.extract_strided_slice %37 {offsets = [0, 0], sizes = [32, 64], strides = [1, 1]} : vector<32x68xf32> to vector<32x64xf32>
    %39 = vector.extract_strided_slice %37 {offsets = [0, 64], sizes = [32, 4], strides = [1, 1]} : vector<32x68xf32> to vector<32x4xf32>
    %cst_20 = arith.constant -4.000000e-01 : f32
    %cst_21 = arith.constant 4.000000e-01 : f32
    %40 = vector.broadcast %cst_20 : f32 to vector<32x4xf32>
    %41 = arith.maximumf %40, %39 : vector<32x4xf32>
    %42 = vector.broadcast %cst_21 : f32 to vector<32x4xf32>
    %43 = arith.minimumf %42, %41 : vector<32x4xf32>
    %cst_22 = arith.constant 5.000000e-01 : f32
    %44 = vector.broadcast %cst_22 : f32 to vector<32x4xf32>
    %45 = arith.addf %44, %43 : vector<32x4xf32>
    %46 = tpu.reciprocal %45 {approx = true} : vector<32x4xf32> -> vector<32x4xf32>
    %c0_23 = arith.constant 0 : index
    %c0_24 = arith.constant 0 : index
    %47 = vector.load %arg10[%c0_23, %c0_24] : memref<4x64xf32, #tpu.memory_space<vmem>>, vector<4x64xf32>
    %cst_25 = arith.constant dense<0.000000e+00> : vector<32x64xf32>
    %48 = tpu.matmul %46, %47, %cst_25 {dimension_numbers = #tpu.dot_dimension_numbers<[1], [0], [0], [1], [0, 0, 1, 1], [], []>} : vector<32x4xf32>, vector<4x64xf32>, vector<32x64xf32> -> vector<32x64xf32>
    %cst_26 = arith.constant 2.62579203 : f32
    %49 = vector.broadcast %cst_26 : f32 to vector<32x64xf32>
    %50 = arith.subf %38, %49 : vector<32x64xf32>
    %51 = arith.mulf %50, %48 : vector<32x64xf32>
    %c0_i32 = arith.constant 0 : i32
    %52 = arith.cmpi eq, %arg1, %c0_i32 : i32
    %c0_i32_27 = arith.constant 0 : i32
    %53 = arith.cmpi eq, %arg2, %c0_i32_27 : i32
    %54 = arith.andi %52, %53 : i1
    %55 = arith.extui %54 : i1 to i32
    %c0_i32_28 = arith.constant 0 : i32
    %56 = arith.cmpi ne, %55, %c0_i32_28 : i32
    scf.if %56 {
      %cst_32 = arith.constant 0xFF800000 : f32
      %63 = vector.broadcast %cst_32 : f32 to vector<1x64xf32>
      %c0_33 = arith.constant 0 : index
      %c0_34 = arith.constant 0 : index
      %64 = vector.load %arg21[%c0_33, %c0_34] : memref<1x64xf32, #tpu.memory_space<vmem>>, vector<1x64xf32>
      tpu.vector_store %arg21[%c0_33, %c0_34], %63 {strides = array<i32>} : memref<1x64xf32, #tpu.memory_space<vmem>>, vector<1x64xf32>,
      %cst_35 = arith.constant 0.000000e+00 : f32
      %65 = vector.broadcast %cst_35 : f32 to vector<1x64xf32>
      %c0_36 = arith.constant 0 : index
      %c0_37 = arith.constant 0 : index
      %66 = vector.load %arg22[%c0_36, %c0_37] : memref<1x64xf32, #tpu.memory_space<vmem>>, vector<1x64xf32>
      tpu.vector_store %arg22[%c0_36, %c0_37], %65 {strides = array<i32>} : memref<1x64xf32, #tpu.memory_space<vmem>>, vector<1x64xf32>,
      %cst_38 = arith.constant 0.000000e+00 : f32
      %67 = vector.broadcast %cst_38 : f32 to vector<32x64xf32>
      %c0_39 = arith.constant 0 : index
      %c0_40 = arith.constant 0 : index
      %68 = vector.load %arg23[%c0_39, %c0_40] : memref<32x64xf32, #tpu.memory_space<vmem>>, vector<32x64xf32>
      tpu.vector_store %arg23[%c0_39, %c0_40], %67 {strides = array<i32>} : memref<32x64xf32, #tpu.memory_space<vmem>>, vector<32x64xf32>,
    } else {
    }
    %c0_i32_29 = arith.constant 0 : i32
    %57 = arith.cmpi eq, %arg1, %c0_i32_29 : i32
    %58 = arith.extui %57 : i1 to i32
    %c0_i32_30 = arith.constant 0 : i32
    %59 = arith.cmpi ne, %58, %c0_i32_30 : i32
    scf.if %59 {
      %c0_32 = arith.constant 0 : index
      %c0_33 = arith.constant 0 : index
      %63 = vector.load %arg21[%c0_32, %c0_33] : memref<1x64xf32, #tpu.memory_space<vmem>>, vector<1x64xf32>
      %cst_34 = arith.constant dense<0xFF800000> : vector<64xf32>
      %64 = vector.multi_reduction <maximumf>, %51, %cst_34 [0] : vector<32x64xf32> to vector<64xf32>
      %65 = vector.shape_cast %64 : vector<64xf32> to vector<1x64xf32>
      %66 = arith.maximumf %63, %65 : vector<1x64xf32>
      %67 = arith.subf %63, %66 : vector<1x64xf32>
      %68 = math.exp %67 : vector<1x64xf32>
      %69 = vector.broadcast %66 : vector<1x64xf32> to vector<32x64xf32>
      %70 = arith.subf %51, %69 : vector<32x64xf32>
      %71 = math.exp %70 : vector<32x64xf32>
      %c0_35 = arith.constant 0 : index
      %c0_36 = arith.constant 0 : index
      %72 = vector.load %arg22[%c0_35, %c0_36] : memref<1x64xf32, #tpu.memory_space<vmem>>, vector<1x64xf32>
      %73 = arith.mulf %68, %72 : vector<1x64xf32>
      %cst_37 = arith.constant dense<0.000000e+00> : vector<64xf32>
      %74 = vector.multi_reduction <add>, %71, %cst_37 [0] : vector<32x64xf32> to vector<64xf32>
      %75 = vector.shape_cast %74 : vector<64xf32> to vector<1x64xf32>
      %76 = arith.addf %73, %75 : vector<1x64xf32>
      %c0_38 = arith.constant 0 : index
      %c0_39 = arith.constant 0 : index
      %77 = vector.load %arg22[%c0_38, %c0_39] : memref<1x64xf32, #tpu.memory_space<vmem>>, vector<1x64xf32>
      tpu.vector_store %arg22[%c0_38, %c0_39], %76 {strides = array<i32>} : memref<1x64xf32, #tpu.memory_space<vmem>>, vector<1x64xf32>,
      %c0_40 = arith.constant 0 : index
      %c0_41 = arith.constant 0 : index
      %78 = vector.load %arg23[%c0_40, %c0_41] : memref<32x64xf32, #tpu.memory_space<vmem>>, vector<32x64xf32>
      %79 = vector.broadcast %68 : vector<1x64xf32> to vector<32x64xf32>
      %80 = arith.mulf %78, %79 : vector<32x64xf32>
      %81 = arith.truncf %31 : vector<32x32xf32> to vector<32x32xbf16>
      %82 = arith.truncf %71 : vector<32x64xf32> to vector<32x64xbf16>
      %cst_42 = arith.constant dense<0.000000e+00> : vector<32x64xf32>
      %83 = tpu.matmul %81, %82, %cst_42 {dimension_numbers = #tpu.dot_dimension_numbers<[0], [0], [1], [1], [0, 1, 1, 1], [], []>} : vector<32x32xbf16>, vector<32x64xbf16>, vector<32x64xf32> -> vector<32x64xf32>
      %84 = arith.addf %80, %83 : vector<32x64xf32>
      %c0_43 = arith.constant 0 : index
      %c0_44 = arith.constant 0 : index
      %85 = vector.load %arg23[%c0_43, %c0_44] : memref<32x64xf32, #tpu.memory_space<vmem>>, vector<32x64xf32>
      tpu.vector_store %arg23[%c0_43, %c0_44], %84 {strides = array<i32>} : memref<32x64xf32, #tpu.memory_space<vmem>>, vector<32x64xf32>,
      %c0_45 = arith.constant 0 : index
      %c0_46 = arith.constant 0 : index
      %86 = vector.load %arg21[%c0_45, %c0_46] : memref<1x64xf32, #tpu.memory_space<vmem>>, vector<1x64xf32>
      tpu.vector_store %arg21[%c0_45, %c0_46], %66 {strides = array<i32>} : memref<1x64xf32, #tpu.memory_space<vmem>>, vector<1x64xf32>,
      %c1_i32_47 = arith.constant 1 : i32
      %87 = arith.cmpi eq, %arg2, %c1_i32_47 : i32
      %88 = arith.extui %87 : i1 to i32
      %c0_i32_48 = arith.constant 0 : i32
      %89 = arith.cmpi ne, %88, %c0_i32_48 : i32
      scf.if %89 {
        %c0_49 = arith.constant 0 : index
        %c0_50 = arith.constant 0 : index
        %90 = vector.load %arg22[%c0_49, %c0_50] : memref<1x64xf32, #tpu.memory_space<vmem>>, vector<1x64xf32>
        %cst_51 = arith.constant 1.000010e+00 : f32
        %91 = vector.broadcast %cst_51 : f32 to vector<1x64xf32>
        %92 = arith.mulf %90, %91 : vector<1x64xf32>
        %cst_52 = arith.constant 1.000000e+00 : f32
        %93 = vector.broadcast %cst_52 : f32 to vector<1x64xf32>
        %94 = arith.divf %93, %92 : vector<1x64xf32>
        %c0_53 = arith.constant 0 : index
        %c0_54 = arith.constant 0 : index
        %95 = vector.load %arg23[%c0_53, %c0_54] : memref<32x64xf32, #tpu.memory_space<vmem>>, vector<32x64xf32>
        %96 = vector.broadcast %94 : vector<1x64xf32> to vector<32x64xf32>
        %97 = arith.mulf %95, %96 : vector<32x64xf32>
        %c0_55 = arith.constant 0 : index
        %c0_56 = arith.constant 0 : index
        %98 = vector.load %arg11[%c0_55, %c0_56] : memref<32x64xf32, #tpu.memory_space<vmem>>, vector<32x64xf32>
        %99 = arith.mulf %97, %98 : vector<32x64xf32>
        %c0_57 = arith.constant 0 : index
        %c0_58 = arith.constant 0 : index
        %100 = vector.load %arg23[%c0_57, %c0_58] : memref<32x64xf32, #tpu.memory_space<vmem>>, vector<32x64xf32>
        tpu.vector_store %arg23[%c0_57, %c0_58], %99 {strides = array<i32>} : memref<32x64xf32, #tpu.memory_space<vmem>>, vector<32x64xf32>,
      } else {
      }
    } else {
    }
    %c1_i32 = arith.constant 1 : i32
    %60 = arith.cmpi eq, %arg1, %c1_i32 : i32
    %61 = arith.extui %60 : i1 to i32
    %c0_i32_31 = arith.constant 0 : i32
    %62 = arith.cmpi ne, %61, %c0_i32_31 : i32
    scf.if %62 {
      %c0_32 = arith.constant 0 : index
      %c0_33 = arith.constant 0 : index
      %63 = vector.load %arg22[%c0_32, %c0_33] : memref<1x64xf32, #tpu.memory_space<vmem>>, vector<1x64xf32>
      %cst_34 = arith.constant 1.000000e+00 : f32
      %64 = vector.broadcast %cst_34 : f32 to vector<1x64xf32>
      %65 = arith.divf %64, %63 : vector<1x64xf32>
      %c0_35 = arith.constant 0 : index
      %c0_36 = arith.constant 0 : index
      %66 = vector.load %arg21[%c0_35, %c0_36] : memref<1x64xf32, #tpu.memory_space<vmem>>, vector<1x64xf32>
      %67 = vector.broadcast %66 : vector<1x64xf32> to vector<32x64xf32>
      %68 = arith.subf %51, %67 : vector<32x64xf32>
      %69 = math.exp %68 : vector<32x64xf32>
      %70 = vector.broadcast %65 : vector<1x64xf32> to vector<32x64xf32>
      %71 = arith.mulf %69, %70 : vector<32x64xf32>
      %72 = arith.truncf %71 : vector<32x64xf32> to vector<32x64xbf16>
      %c0_37 = arith.constant 0 : index
      %c0_38 = arith.constant 0 : index
      %73 = vector.load %arg23[%c0_37, %c0_38] : memref<32x64xf32, #tpu.memory_space<vmem>>, vector<32x64xf32>
      %74 = arith.truncf %73 : vector<32x64xf32> to vector<32x64xbf16>
      %cst_39 = arith.constant dense<0.000000e+00> : vector<32x32xf32>
      %75 = tpu.matmul %72, %74, %cst_39 {dimension_numbers = #tpu.dot_dimension_numbers<[1], [1], [0], [0], [0, 0, 1, 0], [], []>} : vector<32x64xbf16>, vector<32x64xbf16>, vector<32x32xf32> -> vector<32x32xf32>
      %76 = arith.truncf %75 : vector<32x32xf32> to vector<32x32xbf16>
      %c0_40 = arith.constant 0 : index
      %c0_41 = arith.constant 0 : index
      %77 = vector.load %arg12[%c0_40, %c0_41] : memref<32x32xbf16, #tpu.memory_space<vmem>>, vector<32x32xbf16>
      %cst_42 = arith.constant dense<0.000000e+00> : vector<32x32xf32>
      %78 = tpu.matmul %76, %77, %cst_42 {dimension_numbers = #tpu.dot_dimension_numbers<[1], [0], [0], [1], [0, 0, 1, 1], [], []>} : vector<32x32xbf16>, vector<32x32xbf16>, vector<32x32xf32> -> vector<32x32xf32>
      %c0_43 = arith.constant 0 : index
      %c0_44 = arith.constant 0 : index
      %79 = vector.load %arg13[%c0_43, %c0_44] : memref<1x32xf32, #tpu.memory_space<vmem>>, vector<1x32xf32>
      %80 = vector.broadcast %79 : vector<1x32xf32> to vector<32x32xf32>
      %81 = arith.addf %78, %80 : vector<32x32xf32>
      %82 = arith.addf %81, %1 : vector<32x32xf32>
      %c0_45 = arith.constant 0 : index
      %c0_46 = arith.constant 0 : index
      %83 = vector.load %arg14[%c0_45, %c0_46] : memref<1x32xf32, #tpu.memory_space<vmem>>, vector<1x32xf32>
      %c0_47 = arith.constant 0 : index
      %c0_48 = arith.constant 0 : index
      %84 = vector.load %arg15[%c0_47, %c0_48] : memref<1x32xf32, #tpu.memory_space<vmem>>, vector<1x32xf32>
      %cst_49 = arith.constant dense<0.000000e+00> : vector<32xf32>
      %85 = vector.multi_reduction <add>, %82, %cst_49 [1] : vector<32x32xf32> to vector<32xf32>
      %86 = vector.shape_cast %85 : vector<32xf32> to vector<32x1xf32>
      %cst_50 = arith.constant 3.200000e+01 : f32
      %87 = vector.broadcast %cst_50 : f32 to vector<32x1xf32>
      %88 = arith.divf %86, %87 : vector<32x1xf32>
      %89 = vector.broadcast %88 : vector<32x1xf32> to vector<32x32xf32>
      %90 = arith.subf %82, %89 : vector<32x32xf32>
      %91 = arith.mulf %90, %90 : vector<32x32xf32>
      %cst_51 = arith.constant dense<0.000000e+00> : vector<32xf32>
      %92 = vector.multi_reduction <add>, %91, %cst_51 [1] : vector<32x32xf32> to vector<32xf32>
      %93 = vector.shape_cast %92 : vector<32xf32> to vector<32x1xf32>
      %cst_52 = arith.constant 3.200000e+01 : f32
      %94 = vector.broadcast %cst_52 : f32 to vector<32x1xf32>
      %95 = arith.divf %93, %94 : vector<32x1xf32>
      %96 = vector.broadcast %88 : vector<32x1xf32> to vector<32x32xf32>
      %97 = arith.subf %82, %96 : vector<32x32xf32>
      %cst_53 = arith.constant 9.99999974E-6 : f32
      %98 = vector.broadcast %cst_53 : f32 to vector<32x1xf32>
      %99 = arith.addf %95, %98 : vector<32x1xf32>
      %100 = math.rsqrt %99 : vector<32x1xf32>
      %101 = vector.broadcast %100 : vector<32x1xf32> to vector<32x32xf32>
      %102 = arith.mulf %97, %101 : vector<32x32xf32>
      %103 = vector.broadcast %83 : vector<1x32xf32> to vector<32x32xf32>
      %104 = arith.mulf %102, %103 : vector<32x32xf32>
      %105 = vector.broadcast %84 : vector<1x32xf32> to vector<32x32xf32>
      %106 = arith.addf %104, %105 : vector<32x32xf32>
      %107 = arith.truncf %106 : vector<32x32xf32> to vector<32x32xbf16>
      %c0_54 = arith.constant 0 : index
      %c0_55 = arith.constant 0 : index
      %108 = vector.load %arg16[%c0_54, %c0_55] : memref<32x128xbf16, #tpu.memory_space<vmem>>, vector<32x128xbf16>
      %cst_56 = arith.constant dense<0.000000e+00> : vector<32x128xf32>
      %109 = tpu.matmul %107, %108, %cst_56 {dimension_numbers = #tpu.dot_dimension_numbers<[1], [0], [0], [1], [0, 0, 1, 1], [], []>} : vector<32x32xbf16>, vector<32x128xbf16>, vector<32x128xf32> -> vector<32x128xf32>
      %c0_57 = arith.constant 0 : index
      %c0_58 = arith.constant 0 : index
      %110 = vector.load %arg17[%c0_57, %c0_58] : memref<1x128xf32, #tpu.memory_space<vmem>>, vector<1x128xf32>
      %111 = vector.broadcast %110 : vector<1x128xf32> to vector<32x128xf32>
      %112 = arith.addf %109, %111 : vector<32x128xf32>
      %113 = arith.mulf %112, %112 : vector<32x128xf32>
      %114 = arith.mulf %112, %113 : vector<32x128xf32>
      %cst_59 = arith.constant 4.471500e-02 : f32
      %115 = vector.broadcast %cst_59 : f32 to vector<32x128xf32>
      %116 = arith.mulf %115, %114 : vector<32x128xf32>
      %117 = arith.addf %112, %116 : vector<32x128xf32>
      %cst_60 = arith.constant 0.797884583 : f32
      %118 = vector.broadcast %cst_60 : f32 to vector<32x128xf32>
      %119 = arith.mulf %118, %117 : vector<32x128xf32>
      %120 = math.tanh %119 : vector<32x128xf32>
      %cst_61 = arith.constant 1.000000e+00 : f32
      %121 = vector.broadcast %cst_61 : f32 to vector<32x128xf32>
      %122 = arith.addf %121, %120 : vector<32x128xf32>
      %cst_62 = arith.constant 5.000000e-01 : f32
      %123 = vector.broadcast %cst_62 : f32 to vector<32x128xf32>
      %124 = arith.mulf %123, %122 : vector<32x128xf32>
      %125 = arith.mulf %112, %124 : vector<32x128xf32>
      %126 = arith.truncf %125 : vector<32x128xf32> to vector<32x128xbf16>
      %c0_63 = arith.constant 0 : index
      %c0_64 = arith.constant 0 : index
      %127 = vector.load %arg18[%c0_63, %c0_64] : memref<128x32xbf16, #tpu.memory_space<vmem>>, vector<128x32xbf16>
      %cst_65 = arith.constant dense<0.000000e+00> : vector<32x32xf32>
      %128 = tpu.matmul %126, %127, %cst_65 {dimension_numbers = #tpu.dot_dimension_numbers<[1], [0], [0], [1], [0, 0, 1, 1], [], []>} : vector<32x128xbf16>, vector<128x32xbf16>, vector<32x32xf32> -> vector<32x32xf32>
      %c0_66 = arith.constant 0 : index
      %c0_67 = arith.constant 0 : index
      %129 = vector.load %arg19[%c0_66, %c0_67] : memref<1x32xf32, #tpu.memory_space<vmem>>, vector<1x32xf32>
      %130 = vector.broadcast %129 : vector<1x32xf32> to vector<32x32xf32>
      %131 = arith.addf %128, %130 : vector<32x32xf32>
      %132 = arith.addf %131, %82 : vector<32x32xf32>
      %c0_68 = arith.constant 0 : index
      %c0_69 = arith.constant 0 : index
      %c0_70 = arith.constant 0 : index
      %133 = vector.load %arg20[%c0_68, %c0_69, %c0_70] : memref<1x32x32xf32, #tpu.memory_space<vmem>>, vector<1x32x32xf32>
      %134 = vector.shape_cast %133 : vector<1x32x32xf32> to vector<32x32xf32>
      %135 = vector.shape_cast %132 : vector<32x32xf32> to vector<1x32x32xf32>
      tpu.vector_store %arg20[%c0_68, %c0_69, %c0_70], %135 {strides = array<i32>} : memref<1x32x32xf32, #tpu.memory_space<vmem>>, vector<1x32x32xf32>,
    } else {
    }
    return
  }
  func.func @transform_0(%arg0: i32, %arg1: i32, %arg2: i32) -> (i32, i32, i32) {
    %c0_i32 = arith.constant 0 : i32
    %c0_i32_0 = arith.constant 0 : i32
    return %arg0, %arg2, %c0_i32 : i32, i32, i32
  }
  func.func @transform_1(%arg0: i32, %arg1: i32, %arg2: i32) -> (i32, i32) {
    %c0_i32 = arith.constant 0 : i32
    %c0_i32_0 = arith.constant 0 : i32
    %c0_i32_1 = arith.constant 0 : i32
    return %c0_i32, %c0_i32_0 : i32, i32
  }
  func.func @transform_2(%arg0: i32, %arg1: i32, %arg2: i32) -> (i32, i32) {
    %c0_i32 = arith.constant 0 : i32
    %c0_i32_0 = arith.constant 0 : i32
    %c0_i32_1 = arith.constant 0 : i32
    return %c0_i32, %c0_i32_0 : i32, i32
  }
  func.func @transform_3(%arg0: i32, %arg1: i32, %arg2: i32) -> (i32, i32) {
    %c0_i32 = arith.constant 0 : i32
    %c0_i32_0 = arith.constant 0 : i32
    %c0_i32_1 = arith.constant 0 : i32
    return %c0_i32, %c0_i32_0 : i32, i32
  }
  func.func @transform_4(%arg0: i32, %arg1: i32, %arg2: i32) -> (i32, i32) {
    %c0_i32 = arith.constant 0 : i32
    %c0_i32_0 = arith.constant 0 : i32
    %c0_i32_1 = arith.constant 0 : i32
    return %c0_i32, %c0_i32_0 : i32, i32
  }
  func.func @transform_5(%arg0: i32, %arg1: i32, %arg2: i32) -> (i32, i32) {
    %c0_i32 = arith.constant 0 : i32
    %c0_i32_0 = arith.constant 0 : i32
    %c0_i32_1 = arith.constant 0 : i32
    return %c0_i32, %c0_i32_0 : i32, i32
  }
  func.func @transform_6(%arg0: i32, %arg1: i32, %arg2: i32) -> (i32, i32) {
    %c0_i32 = arith.constant 0 : i32
    %c0_i32_0 = arith.constant 0 : i32
    %c0_i32_1 = arith.constant 0 : i32
    return %c0_i32, %c0_i32_0 : i32, i32
  }
  func.func @transform_7(%arg0: i32, %arg1: i32, %arg2: i32) -> (i32, i32) {
    %c0_i32 = arith.constant 0 : i32
    %c0_i32_0 = arith.constant 0 : i32
    %c0_i32_1 = arith.constant 0 : i32
    return %c0_i32, %c0_i32_0 : i32, i32
  }
  func.func @transform_8(%arg0: i32, %arg1: i32, %arg2: i32) -> (i32, i32) {
    %c0_i32 = arith.constant 0 : i32
    %c0_i32_0 = arith.constant 0 : i32
    %c0_i32_1 = arith.constant 0 : i32
    return %c0_i32, %c0_i32_0 : i32, i32
  }
  func.func @transform_9(%arg0: i32, %arg1: i32, %arg2: i32) -> (i32, i32) {
    %c0_i32 = arith.constant 0 : i32
    %c0_i32_0 = arith.constant 0 : i32
    %c0_i32_1 = arith.constant 0 : i32
    return %c0_i32, %c0_i32_0 : i32, i32
  }
  func.func @transform_10(%arg0: i32, %arg1: i32, %arg2: i32) -> (i32, i32) {
    %c0_i32 = arith.constant 0 : i32
    %c0_i32_0 = arith.constant 0 : i32
    %c0_i32_1 = arith.constant 0 : i32
    return %c0_i32, %c0_i32_0 : i32, i32
  }
  func.func @transform_11(%arg0: i32, %arg1: i32, %arg2: i32) -> (i32, i32) {
    %c0_i32 = arith.constant 0 : i32
    %c0_i32_0 = arith.constant 0 : i32
    %c0_i32_1 = arith.constant 0 : i32
    return %c0_i32, %c0_i32_0 : i32, i32
  }
  func.func @transform_12(%arg0: i32, %arg1: i32, %arg2: i32) -> (i32, i32) {
    %c0_i32 = arith.constant 0 : i32
    %c0_i32_0 = arith.constant 0 : i32
    %c0_i32_1 = arith.constant 0 : i32
    return %c0_i32, %c0_i32_0 : i32, i32
  }
  func.func @transform_13(%arg0: i32, %arg1: i32, %arg2: i32) -> (i32, i32) {
    %c0_i32 = arith.constant 0 : i32
    %c0_i32_0 = arith.constant 0 : i32
    %c0_i32_1 = arith.constant 0 : i32
    return %c0_i32, %c0_i32_0 : i32, i32
  }
  func.func @transform_14(%arg0: i32, %arg1: i32, %arg2: i32) -> (i32, i32) {
    %c0_i32 = arith.constant 0 : i32
    %c0_i32_0 = arith.constant 0 : i32
    %c0_i32_1 = arith.constant 0 : i32
    return %c0_i32, %c0_i32_0 : i32, i32
  }
  func.func @transform_15(%arg0: i32, %arg1: i32, %arg2: i32) -> (i32, i32) {
    %c0_i32 = arith.constant 0 : i32
    %c0_i32_0 = arith.constant 0 : i32
    %c0_i32_1 = arith.constant 0 : i32
    return %c0_i32, %c0_i32_0 : i32, i32
  }
  func.func @transform_16(%arg0: i32, %arg1: i32, %arg2: i32) -> (i32, i32) {
    %c0_i32 = arith.constant 0 : i32
    %c0_i32_0 = arith.constant 0 : i32
    %c0_i32_1 = arith.constant 0 : i32
    return %c0_i32, %c0_i32_0 : i32, i32
  }
  func.func @transform_17(%arg0: i32, %arg1: i32, %arg2: i32) -> (i32, i32, i32) {
    %c0_i32 = arith.constant 0 : i32
    %c0_i32_0 = arith.constant 0 : i32
    return %arg0, %arg2, %c0_i32 : i32, i32, i32
  }
}

</mosaic_0001>

<llo_original>
// kernel: tpu_custom_call.1
$region0: #{tpu_custom_call.1}
  #allocation0 [shape = 'u32[]', space=smem, size = 0x4, offset = 0x4, fixed_abs, tag = 'smem constant byte address 0x4 - core index']
  #allocation1 [shape = 'u32[144,128]{1,0:T(1,128)}', space=vmem, size = 0x12000, scoped, tag = 'internal scratch']
  #allocation2 [shape = 'f32[1,64]{1,0:T(1,128)}', space=vmem, size = 0x200, scoped, tag = 'scratch operand']
  #allocation3 [shape = 'f32[1,64]{1,0:T(1,128)}', space=vmem, size = 0x200, scoped, tag = 'scratch operand']
  #allocation4 [shape = 'f32[32,64]{1,0:T(8,128)}', space=vmem, size = 0x4000, scoped, tag = 'scratch operand']
  %s0 = inlined_call_operand.vmem [shape: f32[2,64,32], index: 0, kind: input, shape index: {}]
  %s1 = inlined_call_operand.vmem [shape: f32[1,32], index: 1, kind: input, shape index: {}]
  %s2 = inlined_call_operand.vmem [shape: f32[1,32], index: 2, kind: input, shape index: {}]
  %s3 = inlined_call_operand.vmem [shape: bf16[32,32], index: 3, kind: input, shape index: {}]
  %s4 = inlined_call_operand.vmem [shape: f32[1,32], index: 4, kind: input, shape index: {}]
  %s5 = inlined_call_operand.vmem [shape: bf16[32,68], index: 5, kind: input, shape index: {}]
  %s6 = inlined_call_operand.vmem [shape: f32[1,68], index: 6, kind: input, shape index: {}]
  %s7 = inlined_call_operand.vmem [shape: f32[4,64], index: 7, kind: input, shape index: {}]
  %s8 = inlined_call_operand.vmem [shape: f32[32,64], index: 8, kind: input, shape index: {}]
  %s9 = inlined_call_operand.vmem [shape: bf16[32,32], index: 9, kind: input, shape index: {}]
  %s10 = inlined_call_operand.vmem [shape: f32[1,32], index: 10, kind: input, shape index: {}]
  %s11 = inlined_call_operand.vmem [shape: f32[1,32], index: 11, kind: input, shape index: {}]
  %s12 = inlined_call_operand.vmem [shape: f32[1,32], index: 12, kind: input, shape index: {}]
  %s13 = inlined_call_operand.vmem [shape: bf16[32,128], index: 13, kind: input, shape index: {}]
  %s14 = inlined_call_operand.vmem [shape: f32[1,128], index: 14, kind: input, shape index: {}]
  %s15 = inlined_call_operand.vmem [shape: bf16[128,32], index: 15, kind: input, shape index: {}]
  %s16 = inlined_call_operand.vmem [shape: f32[1,32], index: 16, kind: input, shape index: {}]
  %s17 = inlined_call_operand.vmem [shape: f32[2,64,32], index: 17, kind: output, shape index: {}]
  %s18 = sld [smem:[#allocation0]]
  $region117: #{tpu_custom_call.1} parent=0
    _
  %s20 = ssub.s32 1, %s18
  %s21 = scalar_select 0, %s20, %s18
  loop: start=0, step=1, limit=10
  $region2: #{tpu_custom_call.1} parent=0 // loop_pre_header
    _
  $region3: #{tpu_custom_call.1} parent=0 // loop_header
    %s23 = sphi 0, %s27
    %p24 = scmp.ge.s32.totalorder %s23, 10
    %s30 = sphi 0, %s49
    %s31 = sphi 0, %s45
    %s32 = sphi 0, %s41
    %s33 = sphi 0, %s30
    %s34 = sphi 0, %s31
    %s35 = sphi 0, %s32
    %s36 = sphi 0, %s33
    %s37 = sphi 0, %s34
    %s38 = sphi 0, %s35
    %s54 = sphi 0, %s56
    %s57 = sphi 0, %s54
    %s58 = sphi 0, %s57
    %s74 = sphi 0, %s58
    %s78 = sphi 0, %s78
    %s80 = sphi 0, %s78
    %s81 = sphi 0, %s80
    %s95 = sphi 0, %s81
    %s99 = sphi 0, %s99
    %s101 = sphi 0, %s99
    %s102 = sphi 0, %s101
    %s116 = sphi 0, %s102
    %s120 = sphi 0, %s120
    %s122 = sphi 0, %s120
    %s123 = sphi 0, %s122
    %s137 = sphi 0, %s123
    %s141 = sphi 0, %s141
    %s143 = sphi 0, %s141
    %s144 = sphi 0, %s143
    %s158 = sphi 0, %s144
    %s162 = sphi 0, %s162
    %s164 = sphi 0, %s162
    %s165 = sphi 0, %s164
    %s179 = sphi 0, %s165
    %s183 = sphi 0, %s183
    %s185 = sphi 0, %s183
    %s186 = sphi 0, %s185
    %s200 = sphi 0, %s186
    %s204 = sphi 0, %s204
    %s206 = sphi 0, %s204
    %s207 = sphi 0, %s206
    %s221 = sphi 0, %s207
    %s225 = sphi 0, %s225
    %s227 = sphi 0, %s225
    %s228 = sphi 0, %s227
    %s242 = sphi 0, %s228
    %s246 = sphi 0, %s246
    %s248 = sphi 0, %s246
    %s249 = sphi 0, %s248
    %s263 = sphi 0, %s249
    %s267 = sphi 0, %s267
    %s269 = sphi 0, %s267
    %s270 = sphi 0, %s269
    %s284 = sphi 0, %s270
    %s288 = sphi 0, %s288
    %s290 = sphi 0, %s288
    %s291 = sphi 0, %s290
    %s305 = sphi 0, %s291
    %s309 = sphi 0, %s309
    %s311 = sphi 0, %s309
    %s312 = sphi 0, %s311
    %s326 = sphi 0, %s312
    %s330 = sphi 0, %s330
    %s332 = sphi 0, %s330
    %s333 = sphi 0, %s332
    %s347 = sphi 0, %s333
    %s351 = sphi 0, %s351
    %s353 = sphi 0, %s351
    %s354 = sphi 0, %s353
    %s368 = sphi 0, %s354
    %s372 = sphi 0, %s372
    %s374 = sphi 0, %s372
    %s375 = sphi 0, %s374
    %s389 = sphi 0, %s375
    %s393 = sphi 0, %s393
    %s395 = sphi 0, %s393
    %s396 = sphi 0, %s395
    %s410 = sphi 0, %s396
    %s418 = sphi 0, %s420
    %s421 = sphi 0, %s418
    %s422 = sphi 0, %s421
    %s438 = sphi 0, %s422
  $region4: #{tpu_custom_call.1} parent=0 // loop_header_branch
    %26 = sbr.rel (%p24) target = $region8
  $region5: #{tpu_custom_call.1} parent=0 // loop_body
    %s28 = ssub.s32 %s23, 1
    %s29 = ssub.s32 %s23, 2
    %s39 = sadd.s32 1, %s32
    %p40 = scmp.ge.s32.totalorder %s39, 2
    %s41 = scalar_select %p40, 0, %s39
    %s42 = sadd.s32 1, %s31
    %s43 = scalar_select %p40, %s42, %s31
    %p44 = scmp.ge.s32.totalorder %s43, 2
    %s45 = scalar_select %p44, 0, %s43
    %s46 = sadd.s32 1, %s30
    %s47 = scalar_select %p44, %s46, %s30
    %p48 = scmp.ge.s32.totalorder %s47, 2
    %s49 = scalar_select %p48, 0, %s47
    %s50 = ssub.s32 %s30, %s49
    %s51 = ssub.s32 %s32, %s41
    %s52 = sor.u32 %s50, %s51
    %p53 = scmp.eq.s32.totalorder %s52, 0
    %s55 = sadd.s32 %s54, 1
    %s56 = scalar_select %p53, %s54, %s55
    %p59 = pneg %p53
    %p60 = scmp.eq.s32.totalorder %s23, 7
    %p61 = por %p59, %p60
    %p62 = scmp.ne.s32.totalorder %s54, %s57
    %p63 = scmp.eq.s32.totalorder %s23, 0
    %p64 = por %p62, %p63
    %p65 = scmp.ne.s32.totalorder %s54, %s57
    %p66 = scmp.eq.s32.totalorder %s28, 7
    %p67 = por %p65, %p66
    %p68 = scmp.ne.s32.totalorder %s57, %s58
    %p69 = scmp.eq.s32.totalorder %s28, 0
    %p70 = por %p68, %p69
    %p71 = scmp.ne.s32.totalorder %s57, %s58
    %p72 = scmp.eq.s32.totalorder %s29, 7
    %p73 = por %p71, %p72
    %p75 = scmp.ne.s32.totalorder %s58, %s74
    %p76 = scmp.eq.s32.totalorder %s29, 0
    %p77 = por %p75, %p76
    %s79 = sadd.s32 %s78, 1
    %p82 = scmp.eq.s32.totalorder %s23, 7
    %p83 = scmp.ne.s32.totalorder %s78, %s80
    %p84 = scmp.eq.s32.totalorder %s23, 0
    %p85 = por %p83, %p84
    %p86 = scmp.ne.s32.totalorder %s78, %s80
    %p87 = scmp.eq.s32.totalorder %s28, 7
    %p88 = por %p86, %p87
    %p89 = scmp.ne.s32.totalorder %s80, %s81
    %p90 = scmp.eq.s32.totalorder %s28, 0
    %p91 = por %p89, %p90
    %p92 = scmp.ne.s32.totalorder %s80, %s81
    %p93 = scmp.eq.s32.totalorder %s29, 7
    %p94 = por %p92, %p93
    %p96 = scmp.ne.s32.totalorder %s81, %s95
    %p97 = scmp.eq.s32.totalorder %s29, 0
    %p98 = por %p96, %p97
    %s100 = sadd.s32 %s99, 1
    %p103 = scmp.eq.s32.totalorder %s23, 7
    %p104 = scmp.ne.s32.totalorder %s99, %s101
    %p105 = scmp.eq.s32.totalorder %s23, 0
    %p106 = por %p104, %p105
    %p107 = scmp.ne.s32.totalorder %s99, %s101
    %p108 = scmp.eq.s32.totalorder %s28, 7
    %p109 = por %p107, %p108
    %p110 = scmp.ne.s32.totalorder %s101, %s102
    %p111 = scmp.eq.s32.totalorder %s28, 0
    %p112 = por %p110, %p111
    %p113 = scmp.ne.s32.totalorder %s101, %s102
    %p114 = scmp.eq.s32.totalorder %s29, 7
    %p115 = por %p113, %p114
    %p117 = scmp.ne.s32.totalorder %s102, %s116
    %p118 = scmp.eq.s32.totalorder %s29, 0
    %p119 = por %p117, %p118
    %s121 = sadd.s32 %s120, 1
    %p124 = scmp.eq.s32.totalorder %s23, 7
    %p125 = scmp.ne.s32.totalorder %s120, %s122
    %p126 = scmp.eq.s32.totalorder %s23, 0
    %p127 = por %p125, %p126
    %p128 = scmp.ne.s32.totalorder %s120, %s122
    %p129 = scmp.eq.s32.totalorder %s28, 7
    %p130 = por %p128, %p129
    %p131 = scmp.ne.s32.totalorder %s122, %s123
    %p132 = scmp.eq.s32.totalorder %s28, 0
    %p133 = por %p131, %p132
    %p134 = scmp.ne.s32.totalorder %s122, %s123
    %p135 = scmp.eq.s32.totalorder %s29, 7
    %p136 = por %p134, %p135
    %p138 = scmp.ne.s32.totalorder %s123, %s137
    %p139 = scmp.eq.s32.totalorder %s29, 0
    %p140 = por %p138, %p139
    %s142 = sadd.s32 %s141, 1
    %p145 = scmp.eq.s32.totalorder %s23, 7
    %p146 = scmp.ne.s32.totalorder %s141, %s143
    %p147 = scmp.eq.s32.totalorder %s23, 0
    %p148 = por %p146, %p147
    %p149 = scmp.ne.s32.totalorder %s141, %s143
    %p150 = scmp.eq.s32.totalorder %s28, 7
    %p151 = por %p149, %p150
    %p152 = scmp.ne.s32.totalorder %s143, %s144
    %p153 = scmp.eq.s32.totalorder %s28, 0
    %p154 = por %p152, %p153
    %p155 = scmp.ne.s32.totalorder %s143, %s144
    %p156 = scmp.eq.s32.totalorder %s29, 7
    %p157 = por %p155, %p156
    %p159 = scmp.ne.s32.totalorder %s144, %s158
    %p160 = scmp.eq.s32.totalorder %s29, 0
    %p161 = por %p159, %p160
    %s163 = sadd.s32 %s162, 1
    %p166 = scmp.eq.s32.totalorder %s23, 7
    %p167 = scmp.ne.s32.totalorder %s162, %s164
    %p168 = scmp.eq.s32.totalorder %s23, 0
    %p169 = por %p167, %p168
    %p170 = scmp.ne.s32.totalorder %s162, %s164
    %p171 = scmp.eq.s32.totalorder %s28, 7
    %p172 = por %p170, %p171
    %p173 = scmp.ne.s32.totalorder %s164, %s165
    %p174 = scmp.eq.s32.totalorder %s28, 0
    %p175 = por %p173, %p174
    %p176 = scmp.ne.s32.totalorder %s164, %s165
    %p177 = scmp.eq.s32.totalorder %s29, 7
    %p178 = por %p176, %p177
    %p180 = scmp.ne.s32.totalorder %s165, %s179
    %p181 = scmp.eq.s32.totalorder %s29, 0
    %p182 = por %p180, %p181
    %s184 = sadd.s32 %s183, 1
    %p187 = scmp.eq.s32.totalorder %s23, 7
    %p188 = scmp.ne.s32.totalorder %s183, %s185
    %p189 = scmp.eq.s32.totalorder %s23, 0
    %p190 = por %p188, %p189
    %p191 = scmp.ne.s32.totalorder %s183, %s185
    %p192 = scmp.eq.s32.totalorder %s28, 7
    %p193 = por %p191, %p192
    %p194 = scmp.ne.s32.totalorder %s185, %s186
    %p195 = scmp.eq.s32.totalorder %s28, 0
    %p196 = por %p194, %p195
    %p197 = scmp.ne.s32.totalorder %s185, %s186
    %p198 = scmp.eq.s32.totalorder %s29, 7
    %p199 = por %p197, %p198
    %p201 = scmp.ne.s32.totalorder %s186, %s200
    %p202 = scmp.eq.s32.totalorder %s29, 0
    %p203 = por %p201, %p202
    %s205 = sadd.s32 %s204, 1
    %p208 = scmp.eq.s32.totalorder %s23, 7
    %p209 = scmp.ne.s32.totalorder %s204, %s206
    %p210 = scmp.eq.s32.totalorder %s23, 0
    %p211 = por %p209, %p210
    %p212 = scmp.ne.s32.totalorder %s204, %s206
    %p213 = scmp.eq.s32.totalorder %s28, 7
    %p214 = por %p212, %p213
    %p215 = scmp.ne.s32.totalorder %s206, %s207
    %p216 = scmp.eq.s32.totalorder %s28, 0
    %p217 = por %p215, %p216
    %p218 = scmp.ne.s32.totalorder %s206, %s207
    %p219 = scmp.eq.s32.totalorder %s29, 7
    %p220 = por %p218, %p219
    %p222 = scmp.ne.s32.totalorder %s207, %s221
    %p223 = scmp.eq.s32.totalorder %s29, 0
    %p224 = por %p222, %p223
    %s226 = sadd.s32 %s225, 1
    %p229 = scmp.eq.s32.totalorder %s23, 7
    %p230 = scmp.ne.s32.totalorder %s225, %s227
    %p231 = scmp.eq.s32.totalorder %s23, 0
    %p232 = por %p230, %p231
    %p233 = scmp.ne.s32.totalorder %s225, %s227
    %p234 = scmp.eq.s32.totalorder %s28, 7
    %p235 = por %p233, %p234
    %p236 = scmp.ne.s32.totalorder %s227, %s228
    %p237 = scmp.eq.s32.totalorder %s28, 0
    %p238 = por %p236, %p237
    %p239 = scmp.ne.s32.totalorder %s227, %s228
    %p240 = scmp.eq.s32.totalorder %s29, 7
    %p241 = por %p239, %p240
    %p243 = scmp.ne.s32.totalorder %s228, %s242
    %p244 = scmp.eq.s32.totalorder %s29, 0
    %p245 = por %p243, %p244
    %s247 = sadd.s32 %s246, 1
    %p250 = scmp.eq.s32.totalorder %s23, 7
    %p251 = scmp.ne.s32.totalorder %s246, %s248
    %p252 = scmp.eq.s32.totalorder %s23, 0
    %p253 = por %p251, %p252
    %p254 = scmp.ne.s32.totalorder %s246, %s248
    %p255 = scmp.eq.s32.totalorder %s28, 7
    %p256 = por %p254, %p255
    %p257 = scmp.ne.s32.totalorder %s248, %s249
    %p258 = scmp.eq.s32.totalorder %s28, 0
    %p259 = por %p257, %p258
    %p260 = scmp.ne.s32.totalorder %s248, %s249
    %p261 = scmp.eq.s32.totalorder %s29, 7
    %p262 = por %p260, %p261
    %p264 = scmp.ne.s32.totalorder %s249, %s263
    %p265 = scmp.eq.s32.totalorder %s29, 0
    %p266 = por %p264, %p265
    %s268 = sadd.s32 %s267, 1
    %p271 = scmp.eq.s32.totalorder %s23, 7
    %p272 = scmp.ne.s32.totalorder %s267, %s269
    %p273 = scmp.eq.s32.totalorder %s23, 0
    %p274 = por %p272, %p273
    %p275 = scmp.ne.s32.totalorder %s267, %s269
    %p276 = scmp.eq.s32.totalorder %s28, 7
    %p277 = por %p275, %p276
    %p278 = scmp.ne.s32.totalorder %s269, %s270
    %p279 = scmp.eq.s32.totalorder %s28, 0
    %p280 = por %p278, %p279
    %p281 = scmp.ne.s32.totalorder %s269, %s270
    %p282 = scmp.eq.s32.totalorder %s29, 7
    %p283 = por %p281, %p282
    %p285 = scmp.ne.s32.totalorder %s270, %s284
    %p286 = scmp.eq.s32.totalorder %s29, 0
    %p287 = por %p285, %p286
    %s289 = sadd.s32 %s288, 1
    %p292 = scmp.eq.s32.totalorder %s23, 7
    %p293 = scmp.ne.s32.totalorder %s288, %s290
    %p294 = scmp.eq.s32.totalorder %s23, 0
    %p295 = por %p293, %p294
    %p296 = scmp.ne.s32.totalorder %s288, %s290
    %p297 = scmp.eq.s32.totalorder %s28, 7
    %p298 = por %p296, %p297
    %p299 = scmp.ne.s32.totalorder %s290, %s291
    %p300 = scmp.eq.s32.totalorder %s28, 0
    %p301 = por %p299, %p300
    %p302 = scmp.ne.s32.totalorder %s290, %s291
    %p303 = scmp.eq.s32.totalorder %s29, 7
    %p304 = por %p302, %p303
    %p306 = scmp.ne.s32.totalorder %s291, %s305
    %p307 = scmp.eq.s32.totalorder %s29, 0
    %p308 = por %p306, %p307
    %s310 = sadd.s32 %s309, 1
    %p313 = scmp.eq.s32.totalorder %s23, 7
    %p314 = scmp.ne.s32.totalorder %s309, %s311
    %p315 = scmp.eq.s32.totalorder %s23, 0
    %p316 = por %p314, %p315
    %p317 = scmp.ne.s32.totalorder %s309, %s311
    %p318 = scmp.eq.s32.totalorder %s28, 7
    %p319 = por %p317, %p318
    %p320 = scmp.ne.s32.totalorder %s311, %s312
    %p321 = scmp.eq.s32.totalorder %s28, 0
    %p322 = por %p320, %p321
    %p323 = scmp.ne.s32.totalorder %s311, %s312
    %p324 = scmp.eq.s32.totalorder %s29, 7
    %p325 = por %p323, %p324
    %p327 = scmp.ne.s32.totalorder %s312, %s326
    %p328 = scmp.eq.s32.totalorder %s29, 0
    %p329 = por %p327, %p328
    %s331 = sadd.s32 %s330, 1
    %p334 = scmp.eq.s32.totalorder %s23, 7
    %p335 = scmp.ne.s32.totalorder %s330, %s332
    %p336 = scmp.eq.s32.totalorder %s23, 0
    %p337 = por %p335, %p336
    %p338 = scmp.ne.s32.totalorder %s330, %s332
    %p339 = scmp.eq.s32.totalorder %s28, 7
    %p340 = por %p338, %p339
    %p341 = scmp.ne.s32.totalorder %s332, %s333
    %p342 = scmp.eq.s32.totalorder %s28, 0
    %p343 = por %p341, %p342
    %p344 = scmp.ne.s32.totalorder %s332, %s333
    %p345 = scmp.eq.s32.totalorder %s29, 7
    %p346 = por %p344, %p345
    %p348 = scmp.ne.s32.totalorder %s333, %s347
    %p349 = scmp.eq.s32.totalorder %s29, 0
    %p350 = por %p348, %p349
    %s352 = sadd.s32 %s351, 1
    %p355 = scmp.eq.s32.totalorder %s23, 7
    %p356 = scmp.ne.s32.totalorder %s351, %s353
    %p357 = scmp.eq.s32.totalorder %s23, 0
    %p358 = por %p356, %p357
    %p359 = scmp.ne.s32.totalorder %s351, %s353
    %p360 = scmp.eq.s32.totalorder %s28, 7
    %p361 = por %p359, %p360
    %p362 = scmp.ne.s32.totalorder %s353, %s354
    %p363 = scmp.eq.s32.totalorder %s28, 0
    %p364 = por %p362, %p363
    %p365 = scmp.ne.s32.totalorder %s353, %s354
    %p366 = scmp.eq.s32.totalorder %s29, 7
    %p367 = por %p365, %p366
    %p369 = scmp.ne.s32.totalorder %s354, %s368
    %p370 = scmp.eq.s32.totalorder %s29, 0
    %p371 = por %p369, %p370
    %s373 = sadd.s32 %s372, 1
    %p376 = scmp.eq.s32.totalorder %s23, 7
    %p377 = scmp.ne.s32.totalorder %s372, %s374
    %p378 = scmp.eq.s32.totalorder %s23, 0
    %p379 = por %p377, %p378
    %p380 = scmp.ne.s32.totalorder %s372, %s374
    %p381 = scmp.eq.s32.totalorder %s28, 7
    %p382 = por %p380, %p381
    %p383 = scmp.ne.s32.totalorder %s374, %s375
    %p384 = scmp.eq.s32.totalorder %s28, 0
    %p385 = por %p383, %p384
    %p386 = scmp.ne.s32.totalorder %s374, %s375
    %p387 = scmp.eq.s32.totalorder %s29, 7
    %p388 = por %p386, %p387
    %p390 = scmp.ne.s32.totalorder %s375, %s389
    %p391 = scmp.eq.s32.totalorder %s29, 0
    %p392 = por %p390, %p391
    %s394 = sadd.s32 %s393, 1
    %p397 = scmp.eq.s32.totalorder %s23, 7
    %p398 = scmp.ne.s32.totalorder %s393, %s395
    %p399 = scmp.eq.s32.totalorder %s23, 0
    %p400 = por %p398, %p399
    %p401 = scmp.ne.s32.totalorder %s393, %s395
    %p402 = scmp.eq.s32.totalorder %s28, 7
    %p403 = por %p401, %p402
    %p404 = scmp.ne.s32.totalorder %s395, %s396
    %p405 = scmp.eq.s32.totalorder %s28, 0
    %p406 = por %p404, %p405
    %p407 = scmp.ne.s32.totalorder %s395, %s396
    %p408 = scmp.eq.s32.totalorder %s29, 7
    %p409 = por %p407, %p408
    %p411 = scmp.ne.s32.totalorder %s396, %s410
    %p412 = scmp.eq.s32.totalorder %s29, 0
    %p413 = por %p411, %p412
    %s414 = ssub.s32 %s30, %s49
    %s415 = ssub.s32 %s32, %s41
    %s416 = sor.u32 %s414, %s415
    %p417 = scmp.eq.s32.totalorder %s416, 0
    %s419 = sadd.s32 %s418, 1
    %s420 = scalar_select %p417, %s418, %s419
    %p423 = pneg %p417
    %p424 = scmp.eq.s32.totalorder %s23, 7
    %p425 = por %p423, %p424
    %p426 = scmp.ne.s32.totalorder %s418, %s421
    %p427 = scmp.eq.s32.totalorder %s23, 0
    %p428 = por %p426, %p427
    %p429 = scmp.ne.s32.totalorder %s418, %s421
    %p430 = scmp.eq.s32.totalorder %s28, 7
    %p431 = por %p429, %p430
    %p432 = scmp.ne.s32.totalorder %s421, %s422
    %p433 = scmp.eq.s32.totalorder %s28, 0
    %p434 = por %p432, %p433
    %p435 = scmp.ne.s32.totalorder %s421, %s422
    %p436 = scmp.eq.s32.totalorder %s29, 7
    %p437 = por %p435, %p436
    %p439 = scmp.ne.s32.totalorder %s422, %s438
    %p440 = scmp.eq.s32.totalorder %s29, 0
    %p441 = por %p439, %p440
    %p442 = scmp.le.s32.totalorder 1, %s23
    %p443 = scmp.lt.s32.totalorder %s23, 9
    %p444 = pnand %p442, %p443
    %p445 = pneg %p444
    // Predicated region
    $region9: #{tpu_custom_call.1} parent=5 // pred_check
      _
    $region10: #{tpu_custom_call.1} parent=5 // pred_check_branch
      %447 = sbr.rel (%p444) target = $region12
    $region11: #{tpu_custom_call.1} parent=5 // pred_region
      %s448 = ssub.s32 %s23, 1
      // Predicated region
      $region13: #{tpu_custom_call.1} parent=11 // pred_check
        %p449 = pneg %p91
      $region14: #{tpu_custom_call.1} parent=11 // pred_check_branch
        %451 = sbr.rel (%p449) target = $region16
      $region15: #{tpu_custom_call.1} parent=11 // pred_region
        _
      $region16: #{tpu_custom_call.1} parent=11 // pred_fallthru
        _
      // Predicated region
      $region17: #{tpu_custom_call.1} parent=11 // pred_check
        %p452 = pneg %p112
      $region18: #{tpu_custom_call.1} parent=11 // pred_check_branch
        %454 = sbr.rel (%p452) target = $region20
      $region19: #{tpu_custom_call.1} parent=11 // pred_region
        _
      $region20: #{tpu_custom_call.1} parent=11 // pred_fallthru
        _
      // Predicated region
      $region21: #{tpu_custom_call.1} parent=11 // pred_check
        %p455 = pneg %p133
      $region22: #{tpu_custom_call.1} parent=11 // pred_check_branch
        %457 = sbr.rel (%p455) target = $region24
      $region23: #{tpu_custom_call.1} parent=11 // pred_region
        _
      $region24: #{tpu_custom_call.1} parent=11 // pred_fallthru
        _
      // Predicated region
      $region25: #{tpu_custom_call.1} parent=11 // pred_check
        %p458 = pneg %p154
      $region26: #{tpu_custom_call.1} parent=11 // pred_check_branch
        %460 = sbr.rel (%p458) target = $region28
      $region27: #{tpu_custom_call.1} parent=11 // pred_region
        _
      $region28: #{tpu_custom_call.1} parent=11 // pred_fallthru
        _
      // Predicated region
      $region29: #{tpu_custom_call.1} parent=11 // pred_check
        %p461 = pneg %p175
      $region30: #{tpu_custom_call.1} parent=11 // pred_check_branch
        %463 = sbr.rel (%p461) target = $region32
      $region31: #{tpu_custom_call.1} parent=11 // pred_region
        _
      $region32: #{tpu_custom_call.1} parent=11 // pred_fallthru
        _
      // Predicated region
      $region33: #{tpu_custom_call.1} parent=11 // pred_check
        %p464 = pneg %p196
      $region34: #{tpu_custom_call.1} parent=11 // pred_check_branch
        %466 = sbr.rel (%p464) target = $region36
      $region35: #{tpu_custom_call.1} parent=11 // pred_region
        _
      $region36: #{tpu_custom_call.1} parent=11 // pred_fallthru
        _
      // Predicated region
      $region37: #{tpu_custom_call.1} parent=11 // pred_check
        %p467 = pneg %p217
      $region38: #{tpu_custom_call.1} parent=11 // pred_check_branch
        %469 = sbr.rel (%p467) target = $region40
      $region39: #{tpu_custom_call.1} parent=11 // pred_region
        _
      $region40: #{tpu_custom_call.1} parent=11 // pred_fallthru
        _
      // Predicated region
      $region41: #{tpu_custom_call.1} parent=11 // pred_check
        %p470 = pneg %p238
      $region42: #{tpu_custom_call.1} parent=11 // pred_check_branch
        %472 = sbr.rel (%p470) target = $region44
      $region43: #{tpu_custom_call.1} parent=11 // pred_region
        _
      $region44: #{tpu_custom_call.1} parent=11 // pred_fallthru
        _
      // Predicated region
      $region45: #{tpu_custom_call.1} parent=11 // pred_check
        %p473 = pneg %p259
      $region46: #{tpu_custom_call.1} parent=11 // pred_check_branch
        %475 = sbr.rel (%p473) target = $region48
      $region47: #{tpu_custom_call.1} parent=11 // pred_region
        _
      $region48: #{tpu_custom_call.1} parent=11 // pred_fallthru
        _
      // Predicated region
      $region49: #{tpu_custom_call.1} parent=11 // pred_check
        %p476 = pneg %p280
      $region50: #{tpu_custom_call.1} parent=11 // pred_check_branch
        %478 = sbr.rel (%p476) target = $region52
      $region51: #{tpu_custom_call.1} parent=11 // pred_region
        _
      $region52: #{tpu_custom_call.1} parent=11 // pred_fallthru
        _
      // Predicated region
      $region53: #{tpu_custom_call.1} parent=11 // pred_check
        %p479 = pneg %p301
      $region54: #{tpu_custom_call.1} parent=11 // pred_check_branch
        %481 = sbr.rel (%p479) target = $region56
      $region55: #{tpu_custom_call.1} parent=11 // pred_region
        _
      $region56: #{tpu_custom_call.1} parent=11 // pred_fallthru
        _
      // Predicated region
      $region57: #{tpu_custom_call.1} parent=11 // pred_check
        %p482 = pneg %p322
      $region58: #{tpu_custom_call.1} parent=11 // pred_check_branch
        %484 = sbr.rel (%p482) target = $region60
      $region59: #{tpu_custom_call.1} parent=11 // pred_region
        _
      $region60: #{tpu_custom_call.1} parent=11 // pred_fallthru
        _
      // Predicated region
      $region61: #{tpu_custom_call.1} parent=11 // pred_check
        %p485 = pneg %p343
      $region62: #{tpu_custom_call.1} parent=11 // pred_check_branch
        %487 = sbr.rel (%p485) target = $region64
      $region63: #{tpu_custom_call.1} parent=11 // pred_region
        _
      $region64: #{tpu_custom_call.1} parent=11 // pred_fallthru
        _
      // Predicated region
      $region65: #{tpu_custom_call.1} parent=11 // pred_check
        %p488 = pneg %p364
      $region66: #{tpu_custom_call.1} parent=11 // pred_check_branch
        %490 = sbr.rel (%p488) target = $region68
      $region67: #{tpu_custom_call.1} parent=11 // pred_region
        _
      $region68: #{tpu_custom_call.1} parent=11 // pred_fallthru
        _
      // Predicated region
      $region69: #{tpu_custom_call.1} parent=11 // pred_check
        %p491 = pneg %p385
      $region70: #{tpu_custom_call.1} parent=11 // pred_check_branch
        %493 = sbr.rel (%p491) target = $region72
      $region71: #{tpu_custom_call.1} parent=11 // pred_region
        _
      $region72: #{tpu_custom_call.1} parent=11 // pred_fallthru
        _
      // Predicated region
      $region73: #{tpu_custom_call.1} parent=11 // pred_check
        %p494 = pneg %p406
      $region74: #{tpu_custom_call.1} parent=11 // pred_check_branch
        %496 = sbr.rel (%p494) target = $region76
      $region75: #{tpu_custom_call.1} parent=11 // pred_region
        _
      $region76: #{tpu_custom_call.1} parent=11 // pred_fallthru
        _
    $region12: #{tpu_custom_call.1} parent=5 // pred_fallthru
      _
    %p497 = scmp.lt.s32.totalorder %s23, 8
    // Predicated region
    $region77: #{tpu_custom_call.1} parent=5 // pred_check
      %p498 = pneg %p497
    $region78: #{tpu_custom_call.1} parent=5 // pred_check_branch
      %500 = sbr.rel (%p498) target = $region80
    $region79: #{tpu_custom_call.1} parent=5 // pred_region
      // Predicated region
      $region81: #{tpu_custom_call.1} parent=79 // pred_check
        %p501 = pneg %p64
      $region82: #{tpu_custom_call.1} parent=79 // pred_check_branch
        %503 = sbr.rel (%p501) target = $region84
      $region83: #{tpu_custom_call.1} parent=79 // pred_region
        %s504 = smul.u32 4, %s32
        %p505 = scmp.lt.s32.totalorder %s30, 1
        %s506 = scalar_select %p505, %s30, 1
        %p507 = scmp.lt.s32.totalorder %s504, 7
        %s508 = scalar_select %p507, %s504, 7
        %s509 = smul.addr %s506, 8
        %s510 = sadd.s32 %s508, %s509
        %s511 = smul.addr %s510, 8
        %s512 = scalar_lea.vmem %s0, %s511
        %s513 = smul.u32 4, %s32
      $region84: #{tpu_custom_call.1} parent=79 // pred_fallthru
        _
    $region80: #{tpu_custom_call.1} parent=5 // pred_fallthru
      _
    %p514 = scmp.le.s32.totalorder 1, %s23
    %p515 = scmp.lt.s32.totalorder %s23, 9
    %p516 = pnand %p514, %p515
    %p517 = pneg %p516
    // Predicated region
    $region85: #{tpu_custom_call.1} parent=5 // pred_check
      _
    $region86: #{tpu_custom_call.1} parent=5 // pred_check_branch
      %519 = sbr.rel (%p516) target = $region88
    $region87: #{tpu_custom_call.1} parent=5 // pred_region
      %s520 = ssub.s32 %s23, 1
      %s521 = smul.u32 4, %s35
      %p522 = scmp.lt.s32.totalorder %s33, 1
      %s523 = scalar_select %p522, %s33, 1
      %p524 = scmp.lt.s32.totalorder %s521, 7
      %s525 = scalar_select %p524, %s521, 7
      %s526 = smul.addr %s523, 8
      %s527 = sadd.s32 %s525, %s526
      %s528 = smul.addr %s527, 8
      %s529 = scalar_lea.vmem %s0, %s528
      %p530 = pneg %p70
      %p531 = pneg %p67
      %p532 = pneg %p91
      %p533 = pneg %p88
      %p534 = pneg %p112
      %p535 = pneg %p109
      %p536 = pneg %p133
      %p537 = pneg %p130
      %p538 = pneg %p154
      %p539 = pneg %p151
      %p540 = pneg %p175
      %p541 = pneg %p172
      %p542 = pneg %p196
      %p543 = pneg %p193
      %p544 = pneg %p217
      %p545 = pneg %p214
      %p546 = pneg %p238
      %p547 = pneg %p235
      %p548 = pneg %p259
      %p549 = pneg %p256
      %p550 = pneg %p280
      %p551 = pneg %p277
      %p552 = pneg %p301
      %p553 = pneg %p298
      %p554 = pneg %p322
      %p555 = pneg %p319
      %p556 = pneg %p343
      %p557 = pneg %p340
      %p558 = pneg %p364
      %p559 = pneg %p361
      %p560 = pneg %p385
      %p561 = pneg %p382
      %p562 = pneg %p406
      %p563 = pneg %p403
      %p564 = pneg %p434
      %p565 = pneg %p431
      %s566 = smul.u32 4, %s35
      %p567 = scmp.lt.s32.totalorder %s33, 1
      %s568 = scalar_select %p567, %s33, 1
      %p569 = scmp.lt.s32.totalorder %s566, 7
      %s570 = scalar_select %p569, %s566, 7
      %s571 = smul.addr %s568, 8
      %s572 = sadd.s32 %s570, %s571
      %s573 = smul.addr %s572, 8
      %s574 = scalar_lea.vmem %s17, %s573
      %s575 = smul.u32 4, %s35
      %p576 = scmp.lt.s32.totalorder %s33, 1
      %s577 = scalar_select %p576, %s33, 1
      %p578 = scmp.lt.s32.totalorder %s575, 7
      %s579 = scalar_select %p578, %s575, 7
      %s580 = smul.addr %s577, 8
      %s581 = sadd.s32 %s579, %s580
      %s582 = smul.addr %s581, 8
      %s583 = scalar_lea.vmem %s0, %s582
      %s584 = smul.u32 4, %s35
      %s585 = smul.u32 4, %s35
      %p586 = scmp.lt.s32.totalorder %s33, 1
      %s587 = scalar_select %p586, %s33, 1
      %p588 = scmp.lt.s32.totalorder %s585, 7
      %s589 = scalar_select %p588, %s585, 7
      %s590 = smul.addr %s587, 8
      %s591 = sadd.s32 %s589, %s590
      %s592 = smul.addr %s591, 8
      %s593 = scalar_lea.vmem %s17, %s592
      %s594 = smul.u32 4, %s35
      %v596 = vld [vmem:[%s583] sm:$0xff]
      %v597 = vld [vmem:[%s583 + $0x8] sm:$0xff]
      %v598 = vld [vmem:[%s583 + $0x10] sm:$0xff]
      %v599 = vld [vmem:[%s583 + $0x18] sm:$0xff]
      %v600 = vld [vmem:[%s1] sm:$0x1]
      %v601 = vld [vmem:[%s2] sm:$0x1]
      %vm602 = vcmask 261120
      %v603 = vsel %vm602, %v596, 0.0
      %604 = vadd.xlane.f32.xlu0 %v603
      %v605 = vpop.xlane.xlu0 %604
      %v606 = vsel %vm602, %v597, 0.0
      %607 = vadd.xlane.f32.xlu0 %v606
      %v608 = vpop.xlane.xlu0 %607
      %v609 = vsel %vm602, %v598, 0.0
      %610 = vadd.xlane.f32.xlu0 %v609
      %v611 = vpop.xlane.xlu0 %610
      %v612 = vsel %vm602, %v599, 0.0
      %613 = vadd.xlane.f32.xlu0 %v612
      %v614 = vpop.xlane.xlu0 %613
      %v615 = vrcp.pop 32.0
      %v616 = vmul.f32 %v605, %v615
      %v617 = vmul.f32 %v608, %v615
      %v618 = vmul.f32 %v611, %v615
      %v619 = vmul.f32 %v614, %v615
      %v620 = vsub.f32 %v596, %v616
      %v621 = vsub.f32 %v597, %v617
      %v622 = vsub.f32 %v598, %v618
      %v623 = vsub.f32 %v599, %v619
      %v624 = vmul.f32 %v620, %v620
      %v625 = vmul.f32 %v621, %v621
      %v626 = vmul.f32 %v622, %v622
      %v627 = vmul.f32 %v623, %v623
      %v628 = vsel %vm602, %v624, 0.0
      %629 = vadd.xlane.f32.xlu0 %v628
      %v630 = vpop.xlane.xlu0 %629
      %v631 = vsel %vm602, %v625, 0.0
      %632 = vadd.xlane.f32.xlu0 %v631
      %v633 = vpop.xlane.xlu0 %632
      %v634 = vsel %vm602, %v626, 0.0
      %635 = vadd.xlane.f32.xlu0 %v634
      %v636 = vpop.xlane.xlu0 %635
      %v637 = vsel %vm602, %v627, 0.0
      %638 = vadd.xlane.f32.xlu0 %v637
      %v639 = vpop.xlane.xlu0 %638
      %v640 = vmul.f32 %v630, %v615
      %v641 = vmul.f32 %v633, %v615
      %v642 = vmul.f32 %v636, %v615
      %v643 = vmul.f32 %v639, %v615
      %v644 = vadd.f32 %v640, 1e-05
      %v645 = vadd.f32 %v641, 1e-05
      %v646 = vadd.f32 %v642, 1e-05
      %v647 = vadd.f32 %v643, 1e-05
      %v648 = vrsqrt.pop %v644
      %v649 = vrsqrt.pop %v645
      %v650 = vrsqrt.pop %v646
      %v651 = vrsqrt.pop %v647
      %v652 = vmul.f32 %v620, %v648
      %v653 = vmul.f32 %v621, %v649
      %v654 = vmul.f32 %v622, %v650
      %v655 = vmul.f32 %v623, %v651
      %v657 = vlaneseq
      %v658 = vshrl.u32 %v657, 7
      %v659 = vsub.s32 0, %v658
      %v660 = vrot.slane %v600, %v659
      %v662 = vmul.f32 %v652, %v660
      %v663 = vmul.f32 %v653, %v660
      %v664 = vmul.f32 %v654, %v660
      %v665 = vmul.f32 %v655, %v660
      %v667 = vlaneseq
      %v668 = vshrl.u32 %v667, 7
      %v669 = vsub.s32 0, %v668
      %v670 = vrot.slane %v601, %v669
      %v672 = vadd.f32 %v662, %v670
      %v673 = vadd.f32 %v663, %v670
      %v674 = vadd.f32 %v664, %v670
      %v675 = vadd.f32 %v665, %v670
      %v676 = vpack.c.bf16 %v673, %v672
      %v677 = vpack.c.bf16 %v675, %v674
      %v678 = vld [vmem:[%s3] sm:$0xf]
      %v679 = vld [vmem:[%s3 + $0x4] sm:$0xf]
      %v680 = vld [vmem:[%s3 + $0x8] sm:$0xf]
      %v681 = vld [vmem:[%s3 + $0xc] sm:$0xf]
      %v682 = vld [vmem:[%s4] sm:$0x1]
      %v684 = vlaneseq
      %v685 = vshrl.u32 %v684, 7
      %v686 = vsub.s32 0, %v685
      %v687 = vrot.slane %v682, %v686
      %v693 = vunpack.c.l.b16 %v678
      %v694 = vunpack.c.l.b16 %v679
      %v695 = vunpack.c.l.b16 %v680
      %v696 = vunpack.c.l.b16 %v681
      %v697 = vpack.c.b16 %v694, %v693
      %v698 = vpack.c.b16 %v696, %v695
      %v702 = vsel %vm602, %v676, 0
      %v705 = vsel %vm602, %v677, 0
      %707 = vmatprep.subr.bf16.mxu0 0
      %708 = vmatpush1.bf16.msra.mxu0 0
      %709 = vmatprep.subr.bf16.mxu0 0
      %710 = vmatpush1.bf16.msra.mxu0 0
      %711 = vmatprep.subr.bf16.mxu0 0
      %712 = vmatpush1.bf16.msra.mxu0 0
      %713 = vmatprep.subr.bf16.mxu0 0
      %714 = vmatpush1.bf16.msra.mxu0 0
      %715 = vmatprep.subr.bf16.mxu0 0
      %716 = vmatpush1.bf16.msra.mxu0 0
      %717 = vmatprep.subr.bf16.mxu0 0
      %718 = vmatpush1.bf16.msra.mxu0 0
      %719 = vmatprep.subr.bf16.mxu0 0
      %720 = vmatpush1.bf16.msra.mxu0 %v698
      %721 = vmatprep.subr.bf16.mxu0 0
      %722 = vmatpush1.bf16.msra.mxu0 %v697
      %723 = vmatprep.subr.bf16.mxu0 0
      %724 = vmatpush2.bf16.msra.mxu0 0
      %725 = vmatprep.subr.bf16.mxu0 0
      %726 = vmatpush2.bf16.msra.mxu0 0
      %727 = vmatprep.subr.bf16.mxu0 0
      %728 = vmatpush2.bf16.msra.mxu0 0
      %729 = vmatprep.subr.bf16.mxu0 0
      %730 = vmatpush2.bf16.msra.mxu0 0
      %731 = vmatprep.subr.bf16.mxu0 0
      %732 = vmatpush2.bf16.msra.mxu0 0
      %733 = vmatprep.subr.bf16.mxu0 0
      %734 = vmatpush2.bf16.msra.mxu0 0
      %735 = vmatprep.subr.bf16.mxu0 0
      %736 = vmatpush2.bf16.msra.mxu0 0
      %737 = vmatprep.subr.bf16.mxu0 0
      %738 = vmatpush2.bf16.msra.mxu0 0
      %739 = vmatprep.mubr.bf16.mxu0 0
      %740 = vmatmul.mubr.bf16.gmra.mxu0 %v702
      %v741 = vpop.f32.mrf.mxu0
      %v742 = vadd.f32 %v687, %v741
      %v743 = vpop.f32.mrf.mxu0
      %v744 = vpop.f32.mrf.mxu0
      %v745 = vadd.f32 %v687, %v744
      %v746 = vpop.f32.mrf.mxu0
      %747 = vmatprep.mubr.bf16.mxu0 0
      %748 = vmatmul.mubr.bf16.gmra.mxu0 %v705
      %v749 = vpop.f32.mrf.mxu0
      %v750 = vadd.f32 %v687, %v749
      %v751 = vpop.f32.mrf.mxu0
      %v752 = vpop.f32.mrf.mxu0
      %v753 = vadd.f32 %v687, %v752
      %v754 = vpop.f32.mrf.mxu0
      %755 = vdwg.mxu0
      %v756 = vpack.c.bf16 %v745, %v742
      %v757 = vpack.c.bf16 %v753, %v750
      %v758 = vld [vmem:[%s5] sm:$0xf]
      %v759 = vld [vmem:[%s5 + $0x4] sm:$0xf]
      %v760 = vld [vmem:[%s5 + $0x8] sm:$0xf]
      %v761 = vld [vmem:[%s5 + $0xc] sm:$0xf]
      %v762 = vld [vmem:[%s6] sm:$0x1]
      %v764 = vlaneseq
      %v765 = vshrl.u32 %v764, 7
      %v766 = vsub.s32 0, %v765
      %v767 = vrot.slane %v762, %v766
      %v773 = vunpack.c.l.b16 %v758
      %v774 = vunpack.c.l.b16 %v759
      %v775 = vunpack.c.l.b16 %v760
      %v776 = vunpack.c.l.b16 %v761
      %v777 = vpack.c.b16 %v774, %v773
      %v778 = vpack.c.b16 %v776, %v775
      %v782 = vsel %vm602, %v756, 0
      %v785 = vsel %vm602, %v757, 0
      %787 = vmatprep.subr.bf16.mxu0 0
      %788 = vmatpush1.bf16.msra.mxu0 0
      %789 = vmatprep.subr.bf16.mxu0 0
      %790 = vmatpush1.bf16.msra.mxu0 0
      %791 = vmatprep.subr.bf16.mxu0 0
      %792 = vmatpush1.bf16.msra.mxu0 0
      %793 = vmatprep.subr.bf16.mxu0 0
      %794 = vmatpush1.bf16.msra.mxu0 0
      %795 = vmatprep.subr.bf16.mxu0 0
      %796 = vmatpush1.bf16.msra.mxu0 0
      %797 = vmatprep.subr.bf16.mxu0 0
      %798 = vmatpush1.bf16.msra.mxu0 0
      %799 = vmatprep.subr.bf16.mxu0 0
      %800 = vmatpush1.bf16.msra.mxu0 %v778
      %801 = vmatprep.subr.bf16.mxu0 0
      %802 = vmatpush1.bf16.msra.mxu0 %v777
      %803 = vmatprep.subr.bf16.mxu0 0
      %804 = vmatpush2.bf16.msra.mxu0 0
      %805 = vmatprep.subr.bf16.mxu0 0
      %806 = vmatpush2.bf16.msra.mxu0 0
      %807 = vmatprep.subr.bf16.mxu0 0
      %808 = vmatpush2.bf16.msra.mxu0 0
      %809 = vmatprep.subr.bf16.mxu0 0
      %810 = vmatpush2.bf16.msra.mxu0 0
      %811 = vmatprep.subr.bf16.mxu0 0
      %812 = vmatpush2.bf16.msra.mxu0 0
      %813 = vmatprep.subr.bf16.mxu0 0
      %814 = vmatpush2.bf16.msra.mxu0 0
      %815 = vmatprep.subr.bf16.mxu0 0
      %816 = vmatpush2.bf16.msra.mxu0 0
      %817 = vmatprep.subr.bf16.mxu0 0
      %818 = vmatpush2.bf16.msra.mxu0 0
      %819 = vmatprep.mubr.bf16.mxu0 0
      %820 = vmatmul.mubr.bf16.gmra.mxu0 %v782
      %v821 = vpop.f32.mrf.mxu0
      %v822 = vadd.f32 %v767, %v821
      %v823 = vpop.f32.mrf.mxu0
      %v824 = vpop.f32.mrf.mxu0
      %v825 = vadd.f32 %v767, %v824
      %v826 = vpop.f32.mrf.mxu0
      %827 = vmatprep.mubr.bf16.mxu0 0
      %828 = vmatmul.mubr.bf16.gmra.mxu0 %v785
      %v829 = vpop.f32.mrf.mxu0
      %v830 = vadd.f32 %v767, %v829
      %v831 = vpop.f32.mrf.mxu0
      %v832 = vpop.f32.mrf.mxu0
      %v833 = vadd.f32 %v767, %v832
      %v834 = vpop.f32.mrf.mxu0
      %835 = vdwg.mxu0
      %v836 = vmax.f32 %v822, -0.4
      %v837 = vmax.f32 %v825, -0.4
      %v838 = vmax.f32 %v830, -0.4
      %v839 = vmax.f32 %v833, -0.4
      %v840 = vmin.f32 %v836, 0.4
      %v841 = vmin.f32 %v837, 0.4
      %v842 = vmin.f32 %v838, 0.4
      %v843 = vmin.f32 %v839, 0.4
      %v844 = vadd.f32 %v840, 0.5
      %v845 = vadd.f32 %v841, 0.5
      %v846 = vadd.f32 %v842, 0.5
      %v847 = vadd.f32 %v843, 0.5
      %v848 = vrcp.pop %v844
      %v849 = vrcp.pop %v845
      %v850 = vrcp.pop %v846
      %v851 = vrcp.pop %v847
      %v852 = vld [vmem:[%s7] sm:$0xf]
      %857 = vrot.lane.b32.xlu0 %v848, 64
      %v858 = vpop.permute.xlu0 %857
      %859 = vrot.lane.b32.xlu0 %v849, 64
      %v860 = vpop.permute.xlu0 %859
      %861 = vrot.lane.b32.xlu0 %v850, 64
      %v862 = vpop.permute.xlu0 %861
      %863 = vrot.lane.b32.xlu0 %v851, 64
      %v864 = vpop.permute.xlu0 %863
      %vm865 = vcmask 31744
      %v866 = vsel %vm865, %v858, 0
      %v868 = vsel %vm865, %v860, 0
      %v870 = vsel %vm865, %v862, 0
      %v872 = vsel %vm865, %v864, 0
      %vm874 = vcmask 1043456
      %v876 = vsel %vm874, %v852, 0
      %878 = vmatprep.subr.mxu0 0.0
      %879 = vmatpush1.msra.mxu0 0.0
      %880 = vmatprep.subr.mxu0 0.0
      %881 = vmatpush1.msra.mxu0 0.0
      %882 = vmatprep.subr.mxu0 0.0
      %883 = vmatpush1.msra.mxu0 0.0
      %884 = vmatprep.subr.mxu0 0.0
      %885 = vmatpush1.msra.mxu0 0.0
      %886 = vmatprep.subr.mxu0 0.0
      %887 = vmatpush1.msra.mxu0 0.0
      %888 = vmatprep.subr.mxu0 0.0
      %889 = vmatpush1.msra.mxu0 0.0
      %890 = vmatprep.subr.mxu0 0.0
      %891 = vmatpush1.msra.mxu0 0.0
      %892 = vmatprep.subr.mxu0 0.0
      %893 = vmatpush1.msra.mxu0 0.0
      %894 = vmatprep.subr.mxu0 0.0
      %895 = vmatpush1.msra.mxu0 0.0
      %896 = vmatprep.subr.mxu0 0.0
      %897 = vmatpush1.msra.mxu0 0.0
      %898 = vmatprep.subr.mxu0 0.0
      %899 = vmatpush1.msra.mxu0 0.0
      %900 = vmatprep.subr.mxu0 0.0
      %901 = vmatpush1.msra.mxu0 0.0
      %902 = vmatprep.subr.mxu0 0.0
      %903 = vmatpush1.msra.mxu0 0.0
      %904 = vmatprep.subr.mxu0 0.0
      %905 = vmatpush1.msra.mxu0 0.0
      %906 = vmatprep.subr.mxu0 0.0
      %907 = vmatpush1.msra.mxu0 0.0
      %908 = vmatprep.subr.mxu0 0.0
      %909 = vmatpush1.msra.mxu0 %v876
      %910 = vmatprep.subr.mxu0 0.0
      %911 = vmatpush2.msra.mxu0 0.0
      %912 = vmatprep.subr.mxu0 0.0
      %913 = vmatpush2.msra.mxu0 0.0
      %914 = vmatprep.subr.mxu0 0.0
      %915 = vmatpush2.msra.mxu0 0.0
      %916 = vmatprep.subr.mxu0 0.0
      %917 = vmatpush2.msra.mxu0 0.0
      %918 = vmatprep.subr.mxu0 0.0
      %919 = vmatpush2.msra.mxu0 0.0
      %920 = vmatprep.subr.mxu0 0.0
      %921 = vmatpush2.msra.mxu0 0.0
      %922 = vmatprep.subr.mxu0 0.0
      %923 = vmatpush2.msra.mxu0 0.0
      %924 = vmatprep.subr.mxu0 0.0
      %925 = vmatpush2.msra.mxu0 0.0
      %926 = vmatprep.subr.mxu0 0.0
      %927 = vmatpush2.msra.mxu0 0.0
      %928 = vmatprep.subr.mxu0 0.0
      %929 = vmatpush2.msra.mxu0 0.0
      %930 = vmatprep.subr.mxu0 0.0
      %931 = vmatpush2.msra.mxu0 0.0
      %932 = vmatprep.subr.mxu0 0.0
      %933 = vmatpush2.msra.mxu0 0.0
      %934 = vmatprep.subr.mxu0 0.0
      %935 = vmatpush2.msra.mxu0 0.0
      %936 = vmatprep.subr.mxu0 0.0
      %937 = vmatpush2.msra.mxu0 0.0
      %938 = vmatprep.subr.mxu0 0.0
      %939 = vmatpush2.msra.mxu0 0.0
      %940 = vmatprep.subr.mxu0 0.0
      %941 = vmatpush2.msra.mxu0 0.0
      %942 = vmatprep.mubr.f32.mxu0 0.0
      %943 = vmatmul.mubr.f32.gmra.mxu0 %v866
      %v944 = vpop.f32.mrf.mxu0
      %v945 = vadd.f32 0.0, %v944
      %v946 = vpop.f32.mrf.mxu0
      %947 = vmatprep.mubr.f32.mxu0 0.0
      %948 = vmatmul.mubr.f32.gmra.mxu0 %v868
      %v949 = vpop.f32.mrf.mxu0
      %v950 = vadd.f32 0.0, %v949
      %v951 = vpop.f32.mrf.mxu0
      %952 = vmatprep.mubr.f32.mxu0 0.0
      %953 = vmatmul.mubr.f32.gmra.mxu0 %v870
      %v954 = vpop.f32.mrf.mxu0
      %v955 = vadd.f32 0.0, %v954
      %v956 = vpop.f32.mrf.mxu0
      %957 = vmatprep.mubr.f32.mxu0 0.0
      %958 = vmatmul.mubr.f32.gmra.mxu0 %v872
      %v959 = vpop.f32.mrf.mxu0
      %v960 = vadd.f32 0.0, %v959
      %v961 = vpop.f32.mrf.mxu0
      %962 = vdwg.mxu0
      %v963 = vsub.f32 %v822, 2.625792
      %v964 = vsub.f32 %v825, 2.625792
      %v965 = vsub.f32 %v830, 2.625792
      %v966 = vsub.f32 %v833, 2.625792
      %v967 = vmul.f32 %v963, %v945
      %v968 = vmul.f32 %v964, %v950
      %v969 = vmul.f32 %v965, %v955
      %v970 = vmul.f32 %v966, %v960
      %p971 = scmp.eq.s32.totalorder %s34, 0
      %p972 = scmp.eq.s32.totalorder %s35, 0
      %p973 = pnand %p971, %p972
      %p974 = pneg %p973
      // Predicated region
      $region89: #{tpu_custom_call.1} parent=87 // pred_check
        _
      $region90: #{tpu_custom_call.1} parent=87 // pred_check_branch
        %976 = sbr.rel (%p973) target = $region92
      $region91: #{tpu_custom_call.1} parent=87 // pred_region
        %vm977 = vcmask 516096
        %978 = vst.msk [vmem:[#allocation2] sm:$0x1] %vm977, -inf
        %979 = vst.msk [vmem:[#allocation3] sm:$0x1] %vm977, 0.0
        %vm980 = vcmask 523264
        %981 = vst.msk [vmem:[#allocation4] sm:$0xff] %vm980, 0.0
        %982 = vst.msk [vmem:[#allocation4 + $0x8] sm:$0xff] %vm980, 0.0
        %983 = vst.msk [vmem:[#allocation4 + $0x10] sm:$0xff] %vm980, 0.0
        %984 = vst.msk [vmem:[#allocation4 + $0x18] sm:$0xff] %vm980, 0.0
      $region92: #{tpu_custom_call.1} parent=87 // pred_fallthru
        _
      // Predicated region
      $region93: #{tpu_custom_call.1} parent=87 // pred_check
        %p985 = pneg %p971
      $region94: #{tpu_custom_call.1} parent=87 // pred_check_branch
        %987 = sbr.rel (%p985) target = $region96
      $region95: #{tpu_custom_call.1} parent=87 // pred_region
        %v988 = vld [vmem:[#allocation2] sm:$0x1]
        %vm989 = vcmask 523264
        %v990 = vsel %vm989, %v967, -inf
        %v991 = vsel %vm989, %v968, -inf
        %v992 = vsel %vm989, %v969, -inf
        %v993 = vsel %vm989, %v970, -inf
        %v994 = vmax.f32 %v990, %v991
        %v995 = vmax.f32 %v992, %v993
        %v996 = vmax.f32 %v994, %v995
        %v997 = vrot.slane %v996, 4
        %v998 = vmax.f32 %v996, %v997
        %v999 = vrot.slane %v998, 2
        %v1000 = vmax.f32 %v998, %v999
        %v1001 = vrot.slane %v1000, 1
        %v1002 = vmax.f32 %v1000, %v1001
        %v1003 = vmax.f32 %v988, %v1002
        %v1004 = vsub.f32 %v988, %v1003
        %v1005 = vmul.f32 %v1004, 1.442695
        %v1006 = vpow.pop %v1005
        %v1008 = vlaneseq
        %v1009 = vshrl.u32 %v1008, 7
        %v1010 = vsub.s32 0, %v1009
        %v1011 = vrot.slane %v1003, %v1010
        %v1013 = vsub.f32 %v967, %v1011
        %v1014 = vsub.f32 %v968, %v1011
        %v1015 = vsub.f32 %v969, %v1011
        %v1016 = vsub.f32 %v970, %v1011
        %v1017 = vmul.f32 %v1013, 1.442695
        %v1018 = vpow.pop %v1017
        %v1019 = vmul.f32 %v1014, 1.442695
        %v1020 = vpow.pop %v1019
        %v1021 = vmul.f32 %v1015, 1.442695
        %v1022 = vpow.pop %v1021
        %v1023 = vmul.f32 %v1016, 1.442695
        %v1024 = vpow.pop %v1023
        %v1025 = vld [vmem:[#allocation3] sm:$0x1]
        %v1026 = vmul.f32 %v1006, %v1025
        %v1027 = vsel %vm989, %v1018, 0.0
        %v1028 = vsel %vm989, %v1020, 0.0
        %v1029 = vadd.f32 %v1027, %v1028
        %v1030 = vsel %vm989, %v1022, 0.0
        %v1031 = vadd.f32 %v1029, %v1030
        %v1032 = vsel %vm989, %v1024, 0.0
        %v1033 = vadd.f32 %v1031, %v1032
        %v1034 = vrot.slane %v1033, 4
        %v1035 = vadd.f32 %v1033, %v1034
        %v1036 = vrot.slane %v1035, 2
        %v1037 = vadd.f32 %v1035, %v1036
        %v1038 = vrot.slane %v1037, 1
        %v1039 = vadd.f32 %v1037, %v1038
        %v1040 = vadd.f32 %v1026, %v1039
        %vm1041 = vcmask 516096
        %1042 = vst.msk [vmem:[#allocation3] sm:$0x1] %vm1041, %v1040
        %v1043 = vld [vmem:[#allocation4] sm:$0xff]
        %v1044 = vld [vmem:[#allocation4 + $0x8] sm:$0xff]
        %v1045 = vld [vmem:[#allocation4 + $0x10] sm:$0xff]
        %v1046 = vld [vmem:[#allocation4 + $0x18] sm:$0xff]
        %v1048 = vlaneseq
        %v1049 = vshrl.u32 %v1048, 7
        %v1050 = vsub.s32 0, %v1049
        %v1051 = vrot.slane %v1006, %v1050
        %v1053 = vmul.f32 %v1043, %v1051
        %v1054 = vmul.f32 %v1044, %v1051
        %v1055 = vmul.f32 %v1045, %v1051
        %v1056 = vmul.f32 %v1046, %v1051
        %v1057 = vpack.c.bf16 %v1020, %v1018
        %v1058 = vpack.c.bf16 %v1024, %v1022
        %1059 = vxpose.xlu0.c.b16.start [1/8] %v756, 128
        %1060 = vxpose.xlu0.c.b16.cont [2/8] %v757, 128
        %1061 = vxpose.xlu0.c.b16.cont [3/8] 0, 128
        %1062 = vxpose.xlu0.c.b16.cont [4/8] 0, 128
        %1063 = vxpose.xlu0.c.b16.cont [5/8] 0, 128
        %1064 = vxpose.xlu0.c.b16.cont [6/8] 0, 128
        %1065 = vxpose.xlu0.c.b16.cont [7/8] 0, 128
        %1066 = vxpose.xlu0.c.b16.end [8/8] 0, 128
        %v1067 = vpop.trf.xlu0
        %v1068 = vpop.trf.xlu0
        %v1069 = vpop.trf.xlu0
        %v1070 = vpop.trf.xlu0
        %v1071 = vpop.trf.xlu0
        %v1072 = vpop.trf.xlu0
        %v1073 = vpop.trf.xlu0
        %v1074 = vpop.trf.xlu0
        %v1076 = vsel %vm602, %v1067, 0
        %v1079 = vsel %vm602, %v1068, 0
        %1081 = vmatprep.subr.bf16.mxu0 0
        %1082 = vmatpush1.bf16.msra.mxu0 0
        %1083 = vmatprep.subr.bf16.mxu0 0
        %1084 = vmatpush1.bf16.msra.mxu0 0
        %1085 = vmatprep.subr.bf16.mxu0 0
        %1086 = vmatpush1.bf16.msra.mxu0 0
        %1087 = vmatprep.subr.bf16.mxu0 0
        %1088 = vmatpush1.bf16.msra.mxu0 0
        %1089 = vmatprep.subr.bf16.mxu0 0
        %1090 = vmatpush1.bf16.msra.mxu0 0
        %1091 = vmatprep.subr.bf16.mxu0 0
        %1092 = vmatpush1.bf16.msra.mxu0 0
        %1093 = vmatprep.subr.bf16.mxu0 0
        %1094 = vmatpush1.bf16.msra.mxu0 %v1058
        %1095 = vmatprep.subr.bf16.mxu0 0
        %1096 = vmatpush1.bf16.msra.mxu0 %v1057
        %1097 = vmatprep.subr.bf16.mxu0 0
        %1098 = vmatpush2.bf16.msra.mxu0 0
        %1099 = vmatprep.subr.bf16.mxu0 0
        %1100 = vmatpush2.bf16.msra.mxu0 0
        %1101 = vmatprep.subr.bf16.mxu0 0
        %1102 = vmatpush2.bf16.msra.mxu0 0
        %1103 = vmatprep.subr.bf16.mxu0 0
        %1104 = vmatpush2.bf16.msra.mxu0 0
        %1105 = vmatprep.subr.bf16.mxu0 0
        %1106 = vmatpush2.bf16.msra.mxu0 0
        %1107 = vmatprep.subr.bf16.mxu0 0
        %1108 = vmatpush2.bf16.msra.mxu0 0
        %1109 = vmatprep.subr.bf16.mxu0 0
        %1110 = vmatpush2.bf16.msra.mxu0 0
        %1111 = vmatprep.subr.bf16.mxu0 0
        %1112 = vmatpush2.bf16.msra.mxu0 0
        %1113 = vmatprep.mubr.bf16.mxu0 0
        %1114 = vmatmul.mubr.bf16.gmra.mxu0 %v1076
        %v1115 = vpop.f32.mrf.mxu0
        %v1116 = vadd.f32 0.0, %v1115
        %v1117 = vpop.f32.mrf.mxu0
        %v1118 = vpop.f32.mrf.mxu0
        %v1119 = vadd.f32 0.0, %v1118
        %v1120 = vpop.f32.mrf.mxu0
        %1121 = vmatprep.mubr.bf16.mxu0 0
        %1122 = vmatmul.mubr.bf16.gmra.mxu0 %v1079
        %v1123 = vpop.f32.mrf.mxu0
        %v1124 = vadd.f32 0.0, %v1123
        %v1125 = vpop.f32.mrf.mxu0
        %v1126 = vpop.f32.mrf.mxu0
        %v1127 = vadd.f32 0.0, %v1126
        %v1128 = vpop.f32.mrf.mxu0
        %1129 = vdwg.mxu0
        %v1130 = vadd.f32 %v1053, %v1116
        %v1131 = vadd.f32 %v1054, %v1119
        %v1132 = vadd.f32 %v1055, %v1124
        %v1133 = vadd.f32 %v1056, %v1127
        %1134 = vst.msk [vmem:[#allocation4] sm:$0xff] %vm989, %v1130
        %1135 = vst.msk [vmem:[#allocation4 + $0x8] sm:$0xff] %vm989, %v1131
        %1136 = vst.msk [vmem:[#allocation4 + $0x10] sm:$0xff] %vm989, %v1132
        %1137 = vst.msk [vmem:[#allocation4 + $0x18] sm:$0xff] %vm989, %v1133
        %1138 = vst.msk [vmem:[#allocation2] sm:$0x1] %vm1041, %v1003
        %p1139 = scmp.eq.s32.totalorder %s35, 1
        // Predicated region
        $region97: #{tpu_custom_call.1} parent=95 // pred_check
          %p1140 = pneg %p1139
        $region98: #{tpu_custom_call.1} parent=95 // pred_check_branch
          %1142 = sbr.rel (%p1140) target = $region100
        $region99: #{tpu_custom_call.1} parent=95 // pred_region
          %v1143 = vld [vmem:[#allocation3] sm:$0x1]
          %v1144 = vmul.f32 %v1143, 1.00001
          %v1145 = vrcp.pop %v1144
          %v1146 = vmul.f32 1.0, %v1145
          %v1147 = vld [vmem:[#allocation4] sm:$0xff]
          %v1148 = vld [vmem:[#allocation4 + $0x8] sm:$0xff]
          %v1149 = vld [vmem:[#allocation4 + $0x10] sm:$0xff]
          %v1150 = vld [vmem:[#allocation4 + $0x18] sm:$0xff]
          %v1152 = vlaneseq
          %v1153 = vshrl.u32 %v1152, 7
          %v1154 = vsub.s32 0, %v1153
          %v1155 = vrot.slane %v1146, %v1154
          %v1157 = vmul.f32 %v1147, %v1155
          %v1158 = vmul.f32 %v1148, %v1155
          %v1159 = vmul.f32 %v1149, %v1155
          %v1160 = vmul.f32 %v1150, %v1155
          %v1161 = vld [vmem:[%s8] sm:$0xff]
          %v1162 = vld [vmem:[%s8 + $0x8] sm:$0xff]
          %v1163 = vld [vmem:[%s8 + $0x10] sm:$0xff]
          %v1164 = vld [vmem:[%s8 + $0x18] sm:$0xff]
          %v1165 = vmul.f32 %v1157, %v1161
          %v1166 = vmul.f32 %v1158, %v1162
          %v1167 = vmul.f32 %v1159, %v1163
          %v1168 = vmul.f32 %v1160, %v1164
          %1169 = vst.msk [vmem:[#allocation4] sm:$0xff] %vm989, %v1165
          %1170 = vst.msk [vmem:[#allocation4 + $0x8] sm:$0xff] %vm989, %v1166
          %1171 = vst.msk [vmem:[#allocation4 + $0x10] sm:$0xff] %vm989, %v1167
          %1172 = vst.msk [vmem:[#allocation4 + $0x18] sm:$0xff] %vm989, %v1168
        $region100: #{tpu_custom_call.1} parent=95 // pred_fallthru
          _
      $region96: #{tpu_custom_call.1} parent=87 // pred_fallthru
        _
      %p1173 = scmp.eq.s32.totalorder %s34, 1
      // Predicated region
      $region101: #{tpu_custom_call.1} parent=87 // pred_check
        %p1174 = pneg %p1173
      $region102: #{tpu_custom_call.1} parent=87 // pred_check_branch
        %1176 = sbr.rel (%p1174) target = $region104
      $region103: #{tpu_custom_call.1} parent=87 // pred_region
        %v1177 = vld [vmem:[#allocation3] sm:$0x1]
        %v1178 = vrcp.pop %v1177
        %v1179 = vmul.f32 1.0, %v1178
        %v1180 = vld [vmem:[#allocation2] sm:$0x1]
        %v1182 = vlaneseq
        %v1183 = vshrl.u32 %v1182, 7
        %v1184 = vsub.s32 0, %v1183
        %v1185 = vrot.slane %v1180, %v1184
        %v1187 = vsub.f32 %v967, %v1185
        %v1188 = vsub.f32 %v968, %v1185
        %v1189 = vsub.f32 %v969, %v1185
        %v1190 = vsub.f32 %v970, %v1185
        %v1191 = vmul.f32 %v1187, 1.442695
        %v1192 = vpow.pop %v1191
        %v1193 = vmul.f32 %v1188, 1.442695
        %v1194 = vpow.pop %v1193
        %v1195 = vmul.f32 %v1189, 1.442695
        %v1196 = vpow.pop %v1195
        %v1197 = vmul.f32 %v1190, 1.442695
        %v1198 = vpow.pop %v1197
        %v1200 = vlaneseq
        %v1201 = vshrl.u32 %v1200, 7
        %v1202 = vsub.s32 0, %v1201
        %v1203 = vrot.slane %v1179, %v1202
        %v1205 = vmul.f32 %v1192, %v1203
        %v1206 = vmul.f32 %v1194, %v1203
        %v1207 = vmul.f32 %v1196, %v1203
        %v1208 = vmul.f32 %v1198, %v1203
        %v1209 = vpack.c.bf16 %v1206, %v1205
        %v1210 = vpack.c.bf16 %v1208, %v1207
        %v1211 = vld [vmem:[#allocation4] sm:$0xff]
        %v1212 = vld [vmem:[#allocation4 + $0x8] sm:$0xff]
        %v1213 = vld [vmem:[#allocation4 + $0x10] sm:$0xff]
        %v1214 = vld [vmem:[#allocation4 + $0x18] sm:$0xff]
        %v1215 = vpack.c.bf16 %v1212, %v1211
        %v1216 = vpack.c.bf16 %v1214, %v1213
        %vm1217 = vcmask 523264
        %v1219 = vsel %vm1217, %v1209, 0
        %v1222 = vsel %vm1217, %v1210, 0
        %v1225 = vsel %vm1217, %v1215, 0
        %v1228 = vsel %vm1217, %v1216, 0
        %1230 = vmatprep.subr.bf16.mxu0 0
        %1231 = vmatpush1.bf16.xpose.msra.mxu0 0
        %1232 = vmatprep.subr.bf16.mxu0 0
        %1233 = vmatpush1.bf16.xpose.msra.mxu0 0
        %1234 = vmatprep.subr.bf16.mxu0 0
        %1235 = vmatpush1.bf16.xpose.msra.mxu0 0
        %1236 = vmatprep.subr.bf16.mxu0 0
        %1237 = vmatpush1.bf16.xpose.msra.mxu0 0
        %1238 = vmatprep.subr.bf16.mxu0 0
        %1239 = vmatpush1.bf16.xpose.msra.mxu0 0
        %1240 = vmatprep.subr.bf16.mxu0 0
        %1241 = vmatpush1.bf16.xpose.msra.mxu0 0
        %1242 = vmatprep.subr.bf16.mxu0 0
        %1243 = vmatpush1.bf16.xpose.msra.mxu0 %v1228
        %1244 = vmatprep.subr.bf16.mxu0 0
        %1245 = vmatpush1.bf16.xpose.msra.mxu0 %v1225
        %1246 = vmatprep.subr.bf16.mxu0 0
        %1247 = vmatpush2.bf16.xpose.msra.mxu0 0
        %1248 = vmatprep.subr.bf16.mxu0 0
        %1249 = vmatpush2.bf16.xpose.msra.mxu0 0
        %1250 = vmatprep.subr.bf16.mxu0 0
        %1251 = vmatpush2.bf16.xpose.msra.mxu0 0
        %1252 = vmatprep.subr.bf16.mxu0 0
        %1253 = vmatpush2.bf16.xpose.msra.mxu0 0
        %1254 = vmatprep.subr.bf16.mxu0 0
        %1255 = vmatpush2.bf16.xpose.msra.mxu0 0
        %1256 = vmatprep.subr.bf16.mxu0 0
        %1257 = vmatpush2.bf16.xpose.msra.mxu0 0
        %1258 = vmatprep.subr.bf16.mxu0 0
        %1259 = vmatpush2.bf16.xpose.msra.mxu0 0
        %1260 = vmatprep.subr.bf16.mxu0 0
        %1261 = vmatpush2.bf16.xpose.msra.mxu0 0
        %1262 = vmatprep.mubr.bf16.mxu0 0
        %1263 = vmatmul.mubr.bf16.gmra.mxu0 %v1219
        %v1264 = vpop.f32.mrf.mxu0
        %v1265 = vadd.f32 0.0, %v1264
        %v1266 = vpop.f32.mrf.mxu0
        %v1267 = vpop.f32.mrf.mxu0
        %v1268 = vadd.f32 0.0, %v1267
        %v1269 = vpop.f32.mrf.mxu0
        %1270 = vmatprep.mubr.bf16.mxu0 0
        %1271 = vmatmul.mubr.bf16.gmra.mxu0 %v1222
        %v1272 = vpop.f32.mrf.mxu0
        %v1273 = vadd.f32 0.0, %v1272
        %v1274 = vpop.f32.mrf.mxu0
        %v1275 = vpop.f32.mrf.mxu0
        %v1276 = vadd.f32 0.0, %v1275
        %v1277 = vpop.f32.mrf.mxu0
        %1278 = vdwg.mxu0
        %v1279 = vpack.c.bf16 %v1268, %v1265
        %v1280 = vpack.c.bf16 %v1276, %v1273
        %v1281 = vld [vmem:[%s9] sm:$0xf]
        %v1282 = vld [vmem:[%s9 + $0x4] sm:$0xf]
        %v1283 = vld [vmem:[%s9 + $0x8] sm:$0xf]
        %v1284 = vld [vmem:[%s9 + $0xc] sm:$0xf]
        %v1285 = vld [vmem:[%s10] sm:$0x1]
        %v1287 = vlaneseq
        %v1288 = vshrl.u32 %v1287, 7
        %v1289 = vsub.s32 0, %v1288
        %v1290 = vrot.slane %v1285, %v1289
        %v1296 = vunpack.c.l.b16 %v1281
        %v1297 = vunpack.c.l.b16 %v1282
        %v1298 = vunpack.c.l.b16 %v1283
        %v1299 = vunpack.c.l.b16 %v1284
        %v1300 = vpack.c.b16 %v1297, %v1296
        %v1301 = vpack.c.b16 %v1299, %v1298
        %v1305 = vsel %vm602, %v1279, 0
        %v1308 = vsel %vm602, %v1280, 0
        %1310 = vmatprep.subr.bf16.mxu0 0
        %1311 = vmatpush1.bf16.msra.mxu0 0
        %1312 = vmatprep.subr.bf16.mxu0 0
        %1313 = vmatpush1.bf16.msra.mxu0 0
        %1314 = vmatprep.subr.bf16.mxu0 0
        %1315 = vmatpush1.bf16.msra.mxu0 0
        %1316 = vmatprep.subr.bf16.mxu0 0
        %1317 = vmatpush1.bf16.msra.mxu0 0
        %1318 = vmatprep.subr.bf16.mxu0 0
        %1319 = vmatpush1.bf16.msra.mxu0 0
        %1320 = vmatprep.subr.bf16.mxu0 0
        %1321 = vmatpush1.bf16.msra.mxu0 0
        %1322 = vmatprep.subr.bf16.mxu0 0
        %1323 = vmatpush1.bf16.msra.mxu0 %v1301
        %1324 = vmatprep.subr.bf16.mxu0 0
        %1325 = vmatpush1.bf16.msra.mxu0 %v1300
        %1326 = vmatprep.subr.bf16.mxu0 0
        %1327 = vmatpush2.bf16.msra.mxu0 0
        %1328 = vmatprep.subr.bf16.mxu0 0
        %1329 = vmatpush2.bf16.msra.mxu0 0
        %1330 = vmatprep.subr.bf16.mxu0 0
        %1331 = vmatpush2.bf16.msra.mxu0 0
        %1332 = vmatprep.subr.bf16.mxu0 0
        %1333 = vmatpush2.bf16.msra.mxu0 0
        %1334 = vmatprep.subr.bf16.mxu0 0
        %1335 = vmatpush2.bf16.msra.mxu0 0
        %1336 = vmatprep.subr.bf16.mxu0 0
        %1337 = vmatpush2.bf16.msra.mxu0 0
        %1338 = vmatprep.subr.bf16.mxu0 0
        %1339 = vmatpush2.bf16.msra.mxu0 0
        %1340 = vmatprep.subr.bf16.mxu0 0
        %1341 = vmatpush2.bf16.msra.mxu0 0
        %1342 = vmatprep.mubr.bf16.mxu0 0
        %1343 = vmatmul.mubr.bf16.gmra.mxu0 %v1305
        %v1344 = vpop.f32.mrf.mxu0
        %v1345 = vadd.f32 %v1290, %v1344
        %v1346 = vpop.f32.mrf.mxu0
        %v1347 = vpop.f32.mrf.mxu0
        %v1348 = vadd.f32 %v1290, %v1347
        %v1349 = vpop.f32.mrf.mxu0
        %1350 = vmatprep.mubr.bf16.mxu0 0
        %1351 = vmatmul.mubr.bf16.gmra.mxu0 %v1308
        %v1352 = vpop.f32.mrf.mxu0
        %v1353 = vadd.f32 %v1290, %v1352
        %v1354 = vpop.f32.mrf.mxu0
        %v1355 = vpop.f32.mrf.mxu0
        %v1356 = vadd.f32 %v1290, %v1355
        %v1357 = vpop.f32.mrf.mxu0
        %1358 = vdwg.mxu0
        %v1359 = vadd.f32 %v1345, %v596
        %v1360 = vadd.f32 %v1348, %v597
        %v1361 = vadd.f32 %v1353, %v598
        %v1362 = vadd.f32 %v1356, %v599
        %v1363 = vld [vmem:[%s11] sm:$0x1]
        %v1364 = vld [vmem:[%s12] sm:$0x1]
        %v1365 = vsel %vm602, %v1359, 0.0
        %1366 = vadd.xlane.f32.xlu0 %v1365
        %v1367 = vpop.xlane.xlu0 %1366
        %v1368 = vsel %vm602, %v1360, 0.0
        %1369 = vadd.xlane.f32.xlu0 %v1368
        %v1370 = vpop.xlane.xlu0 %1369
        %v1371 = vsel %vm602, %v1361, 0.0
        %1372 = vadd.xlane.f32.xlu0 %v1371
        %v1373 = vpop.xlane.xlu0 %1372
        %v1374 = vsel %vm602, %v1362, 0.0
        %1375 = vadd.xlane.f32.xlu0 %v1374
        %v1376 = vpop.xlane.xlu0 %1375
        %v1377 = vmul.f32 %v1367, %v615
        %v1378 = vmul.f32 %v1370, %v615
        %v1379 = vmul.f32 %v1373, %v615
        %v1380 = vmul.f32 %v1376, %v615
        %v1381 = vsub.f32 %v1359, %v1377
        %v1382 = vsub.f32 %v1360, %v1378
        %v1383 = vsub.f32 %v1361, %v1379
        %v1384 = vsub.f32 %v1362, %v1380
        %v1385 = vmul.f32 %v1381, %v1381
        %v1386 = vmul.f32 %v1382, %v1382
        %v1387 = vmul.f32 %v1383, %v1383
        %v1388 = vmul.f32 %v1384, %v1384
        %v1389 = vsel %vm602, %v1385, 0.0
        %1390 = vadd.xlane.f32.xlu0 %v1389
        %v1391 = vpop.xlane.xlu0 %1390
        %v1392 = vsel %vm602, %v1386, 0.0
        %1393 = vadd.xlane.f32.xlu0 %v1392
        %v1394 = vpop.xlane.xlu0 %1393
        %v1395 = vsel %vm602, %v1387, 0.0
        %1396 = vadd.xlane.f32.xlu0 %v1395
        %v1397 = vpop.xlane.xlu0 %1396
        %v1398 = vsel %vm602, %v1388, 0.0
        %1399 = vadd.xlane.f32.xlu0 %v1398
        %v1400 = vpop.xlane.xlu0 %1399
        %v1401 = vmul.f32 %v1391, %v615
        %v1402 = vmul.f32 %v1394, %v615
        %v1403 = vmul.f32 %v1397, %v615
        %v1404 = vmul.f32 %v1400, %v615
        %v1405 = vadd.f32 %v1401, 1e-05
        %v1406 = vadd.f32 %v1402, 1e-05
        %v1407 = vadd.f32 %v1403, 1e-05
        %v1408 = vadd.f32 %v1404, 1e-05
        %v1409 = vrsqrt.pop %v1405
        %v1410 = vrsqrt.pop %v1406
        %v1411 = vrsqrt.pop %v1407
        %v1412 = vrsqrt.pop %v1408
        %v1413 = vmul.f32 %v1381, %v1409
        %v1414 = vmul.f32 %v1382, %v1410
        %v1415 = vmul.f32 %v1383, %v1411
        %v1416 = vmul.f32 %v1384, %v1412
        %v1418 = vlaneseq
        %v1419 = vshrl.u32 %v1418, 7
        %v1420 = vsub.s32 0, %v1419
        %v1421 = vrot.slane %v1363, %v1420
        %v1423 = vmul.f32 %v1413, %v1421
        %v1424 = vmul.f32 %v1414, %v1421
        %v1425 = vmul.f32 %v1415, %v1421
        %v1426 = vmul.f32 %v1416, %v1421
        %v1428 = vlaneseq
        %v1429 = vshrl.u32 %v1428, 7
        %v1430 = vsub.s32 0, %v1429
        %v1431 = vrot.slane %v1364, %v1430
        %v1433 = vadd.f32 %v1423, %v1431
        %v1434 = vadd.f32 %v1424, %v1431
        %v1435 = vadd.f32 %v1425, %v1431
        %v1436 = vadd.f32 %v1426, %v1431
        %v1437 = vpack.c.bf16 %v1434, %v1433
        %v1438 = vpack.c.bf16 %v1436, %v1435
        %v1439 = vld [vmem:[%s13] sm:$0xf]
        %v1440 = vld [vmem:[%s13 + $0x4] sm:$0xf]
        %v1441 = vld [vmem:[%s13 + $0x8] sm:$0xf]
        %v1442 = vld [vmem:[%s13 + $0xc] sm:$0xf]
        %v1443 = vld [vmem:[%s14] sm:$0x1]
        %v1445 = vlaneseq
        %v1446 = vshrl.u32 %v1445, 7
        %v1447 = vsub.s32 0, %v1446
        %v1448 = vrot.slane %v1443, %v1447
        %v1454 = vunpack.c.l.b16 %v1439
        %v1455 = vunpack.c.l.b16 %v1440
        %v1456 = vunpack.c.l.b16 %v1441
        %v1457 = vunpack.c.l.b16 %v1442
        %v1458 = vpack.c.b16 %v1455, %v1454
        %v1459 = vpack.c.b16 %v1457, %v1456
        %v1463 = vsel %vm602, %v1437, 0
        %v1466 = vsel %vm602, %v1438, 0
        %1468 = vmatprep.subr.bf16.mxu0 0
        %1469 = vmatpush1.bf16.msra.mxu0 0
        %1470 = vmatprep.subr.bf16.mxu0 0
        %1471 = vmatpush1.bf16.msra.mxu0 0
        %1472 = vmatprep.subr.bf16.mxu0 0
        %1473 = vmatpush1.bf16.msra.mxu0 0
        %1474 = vmatprep.subr.bf16.mxu0 0
        %1475 = vmatpush1.bf16.msra.mxu0 0
        %1476 = vmatprep.subr.bf16.mxu0 0
        %1477 = vmatpush1.bf16.msra.mxu0 0
        %1478 = vmatprep.subr.bf16.mxu0 0
        %1479 = vmatpush1.bf16.msra.mxu0 0
        %1480 = vmatprep.subr.bf16.mxu0 0
        %1481 = vmatpush1.bf16.msra.mxu0 %v1459
        %1482 = vmatprep.subr.bf16.mxu0 0
        %1483 = vmatpush1.bf16.msra.mxu0 %v1458
        %1484 = vmatprep.subr.bf16.mxu0 0
        %1485 = vmatpush2.bf16.msra.mxu0 0
        %1486 = vmatprep.subr.bf16.mxu0 0
        %1487 = vmatpush2.bf16.msra.mxu0 0
        %1488 = vmatprep.subr.bf16.mxu0 0
        %1489 = vmatpush2.bf16.msra.mxu0 0
        %1490 = vmatprep.subr.bf16.mxu0 0
        %1491 = vmatpush2.bf16.msra.mxu0 0
        %1492 = vmatprep.subr.bf16.mxu0 0
        %1493 = vmatpush2.bf16.msra.mxu0 0
        %1494 = vmatprep.subr.bf16.mxu0 0
        %1495 = vmatpush2.bf16.msra.mxu0 0
        %1496 = vmatprep.subr.bf16.mxu0 0
        %1497 = vmatpush2.bf16.msra.mxu0 0
        %1498 = vmatprep.subr.bf16.mxu0 0
        %1499 = vmatpush2.bf16.msra.mxu0 0
        %1500 = vmatprep.mubr.bf16.mxu0 0
        %1501 = vmatmul.mubr.bf16.gmra.mxu0 %v1463
        %v1502 = vpop.f32.mrf.mxu0
        %v1503 = vadd.f32 %v1448, %v1502
        %v1504 = vpop.f32.mrf.mxu0
        %v1505 = vpop.f32.mrf.mxu0
        %v1506 = vadd.f32 %v1448, %v1505
        %v1507 = vpop.f32.mrf.mxu0
        %1508 = vmatprep.mubr.bf16.mxu0 0
        %1509 = vmatmul.mubr.bf16.gmra.mxu0 %v1466
        %v1510 = vpop.f32.mrf.mxu0
        %v1511 = vadd.f32 %v1448, %v1510
        %v1512 = vpop.f32.mrf.mxu0
        %v1513 = vpop.f32.mrf.mxu0
        %v1514 = vadd.f32 %v1448, %v1513
        %v1515 = vpop.f32.mrf.mxu0
        %1516 = vdwg.mxu0
        %v1517 = vmul.f32 %v1503, %v1503
        %v1518 = vmul.f32 %v1506, %v1506
        %v1519 = vmul.f32 %v1511, %v1511
        %v1520 = vmul.f32 %v1514, %v1514
        %v1521 = vmul.f32 %v1503, %v1517
        %v1522 = vmul.f32 %v1506, %v1518
        %v1523 = vmul.f32 %v1511, %v1519
        %v1524 = vmul.f32 %v1514, %v1520
        %v1525 = vmul.f32 %v1521, 0.044715
        %v1526 = vmul.f32 %v1522, 0.044715
        %v1527 = vmul.f32 %v1523, 0.044715
        %v1528 = vmul.f32 %v1524, 0.044715
        %v1529 = vadd.f32 %v1503, %v1525
        %v1530 = vadd.f32 %v1506, %v1526
        %v1531 = vadd.f32 %v1511, %v1527
        %v1532 = vadd.f32 %v1514, %v1528
        %v1533 = vmul.f32 %v1529, 0.7978846
        %v1534 = vmul.f32 %v1530, 0.7978846
        %v1535 = vmul.f32 %v1531, 0.7978846
        %v1536 = vmul.f32 %v1532, 0.7978846
        %v1537 = vtanh.pop %v1533
        %v1538 = vtanh.pop %v1534
        %v1539 = vtanh.pop %v1535
        %v1540 = vtanh.pop %v1536
        %v1541 = vadd.f32 %v1537, 1.0
        %v1542 = vadd.f32 %v1538, 1.0
        %v1543 = vadd.f32 %v1539, 1.0
        %v1544 = vadd.f32 %v1540, 1.0
        %v1545 = vmul.f32 %v1541, 0.5
        %v1546 = vmul.f32 %v1542, 0.5
        %v1547 = vmul.f32 %v1543, 0.5
        %v1548 = vmul.f32 %v1544, 0.5
        %v1549 = vmul.f32 %v1503, %v1545
        %v1550 = vmul.f32 %v1506, %v1546
        %v1551 = vmul.f32 %v1511, %v1547
        %v1552 = vmul.f32 %v1514, %v1548
        %v1553 = vpack.c.bf16 %v1550, %v1549
        %v1554 = vpack.c.bf16 %v1552, %v1551
        %v1555 = vld [vmem:[%s15] sm:$0xf]
        %v1556 = vld [vmem:[%s15 + $0x4] sm:$0xf]
        %v1557 = vld [vmem:[%s15 + $0x8] sm:$0xf]
        %v1558 = vld [vmem:[%s15 + $0xc] sm:$0xf]
        %v1559 = vld [vmem:[%s15 + $0x10] sm:$0xf]
        %v1560 = vld [vmem:[%s15 + $0x14] sm:$0xf]
        %v1561 = vld [vmem:[%s15 + $0x18] sm:$0xf]
        %v1562 = vld [vmem:[%s15 + $0x1c] sm:$0xf]
        %v1563 = vld [vmem:[%s15 + $0x20] sm:$0xf]
        %v1564 = vld [vmem:[%s15 + $0x24] sm:$0xf]
        %v1565 = vld [vmem:[%s15 + $0x28] sm:$0xf]
        %v1566 = vld [vmem:[%s15 + $0x2c] sm:$0xf]
        %v1567 = vld [vmem:[%s15 + $0x30] sm:$0xf]
        %v1568 = vld [vmem:[%s15 + $0x34] sm:$0xf]
        %v1569 = vld [vmem:[%s15 + $0x38] sm:$0xf]
        %v1570 = vld [vmem:[%s15 + $0x3c] sm:$0xf]
        %v1571 = vld [vmem:[%s16] sm:$0x1]
        %v1573 = vlaneseq
        %v1574 = vshrl.u32 %v1573, 7
        %v1575 = vsub.s32 0, %v1574
        %v1576 = vrot.slane %v1571, %v1575
        %v1594 = vunpack.c.l.b16 %v1555
        %v1595 = vunpack.c.l.b16 %v1556
        %v1596 = vunpack.c.l.b16 %v1557
        %v1597 = vunpack.c.l.b16 %v1558
        %v1598 = vunpack.c.l.b16 %v1559
        %v1599 = vunpack.c.l.b16 %v1560
        %v1600 = vunpack.c.l.b16 %v1561
        %v1601 = vunpack.c.l.b16 %v1562
        %v1602 = vunpack.c.l.b16 %v1563
        %v1603 = vunpack.c.l.b16 %v1564
        %v1604 = vunpack.c.l.b16 %v1565
        %v1605 = vunpack.c.l.b16 %v1566
        %v1606 = vunpack.c.l.b16 %v1567
        %v1607 = vunpack.c.l.b16 %v1568
        %v1608 = vunpack.c.l.b16 %v1569
        %v1609 = vunpack.c.l.b16 %v1570
        %v1610 = vpack.c.b16 %v1595, %v1594
        %v1611 = vpack.c.b16 %v1597, %v1596
        %v1612 = vpack.c.b16 %v1599, %v1598
        %v1613 = vpack.c.b16 %v1601, %v1600
        %v1614 = vpack.c.b16 %v1603, %v1602
        %v1615 = vpack.c.b16 %v1605, %v1604
        %v1616 = vpack.c.b16 %v1607, %v1606
        %v1617 = vpack.c.b16 %v1609, %v1608
        %1626 = vmatprep.subr.bf16.mxu0 0
        %1627 = vmatpush1.bf16.msra.mxu0 %v1617
        %1628 = vmatprep.subr.bf16.mxu0 0
        %1629 = vmatpush1.bf16.msra.mxu0 %v1616
        %1630 = vmatprep.subr.bf16.mxu0 0
        %1631 = vmatpush1.bf16.msra.mxu0 %v1615
        %1632 = vmatprep.subr.bf16.mxu0 0
        %1633 = vmatpush1.bf16.msra.mxu0 %v1614
        %1634 = vmatprep.subr.bf16.mxu0 0
        %1635 = vmatpush1.bf16.msra.mxu0 %v1613
        %1636 = vmatprep.subr.bf16.mxu0 0
        %1637 = vmatpush1.bf16.msra.mxu0 %v1612
        %1638 = vmatprep.subr.bf16.mxu0 0
        %1639 = vmatpush1.bf16.msra.mxu0 %v1611
        %1640 = vmatprep.subr.bf16.mxu0 0
        %1641 = vmatpush1.bf16.msra.mxu0 %v1610
        %1642 = vmatprep.subr.bf16.mxu0 0
        %1643 = vmatpush2.bf16.msra.mxu0 0
        %1644 = vmatprep.subr.bf16.mxu0 0
        %1645 = vmatpush2.bf16.msra.mxu0 0
        %1646 = vmatprep.subr.bf16.mxu0 0
        %1647 = vmatpush2.bf16.msra.mxu0 0
        %1648 = vmatprep.subr.bf16.mxu0 0
        %1649 = vmatpush2.bf16.msra.mxu0 0
        %1650 = vmatprep.subr.bf16.mxu0 0
        %1651 = vmatpush2.bf16.msra.mxu0 0
        %1652 = vmatprep.subr.bf16.mxu0 0
        %1653 = vmatpush2.bf16.msra.mxu0 0
        %1654 = vmatprep.subr.bf16.mxu0 0
        %1655 = vmatpush2.bf16.msra.mxu0 0
        %1656 = vmatprep.subr.bf16.mxu0 0
        %1657 = vmatpush2.bf16.msra.mxu0 0
        %1658 = vmatprep.mubr.bf16.mxu0 0
        %1659 = vmatmul.mubr.bf16.gmra.mxu0 %v1553
        %v1660 = vpop.f32.mrf.mxu0
        %v1661 = vadd.f32 %v1576, %v1660
        %v1662 = vpop.f32.mrf.mxu0
        %v1663 = vpop.f32.mrf.mxu0
        %v1664 = vadd.f32 %v1576, %v1663
        %v1665 = vpop.f32.mrf.mxu0
        %1666 = vmatprep.mubr.bf16.mxu0 0
        %1667 = vmatmul.mubr.bf16.gmra.mxu0 %v1554
        %v1668 = vpop.f32.mrf.mxu0
        %v1669 = vadd.f32 %v1576, %v1668
        %v1670 = vpop.f32.mrf.mxu0
        %v1671 = vpop.f32.mrf.mxu0
        %v1672 = vadd.f32 %v1576, %v1671
        %v1673 = vpop.f32.mrf.mxu0
        %1674 = vdwg.mxu0
        %v1675 = vadd.f32 %v1661, %v1359
        %v1676 = vadd.f32 %v1664, %v1360
        %v1677 = vadd.f32 %v1669, %v1361
        %v1678 = vadd.f32 %v1672, %v1362
        %1679 = vst.msk [vmem:[%s593] sm:$0xff] %vm602, %v1675
        %1680 = vst.msk [vmem:[%s593 + $0x8] sm:$0xff] %vm602, %v1676
        %1681 = vst.msk [vmem:[%s593 + $0x10] sm:$0xff] %vm602, %v1677
        %1682 = vst.msk [vmem:[%s593 + $0x18] sm:$0xff] %vm602, %v1678
      $region104: #{tpu_custom_call.1} parent=87 // pred_fallthru
        _
      %s1683 = smul.u32 4, %s35
      %p1684 = scmp.lt.s32.totalorder %s33, 1
      %s1685 = scalar_select %p1684, %s33, 1
      %p1686 = scmp.lt.s32.totalorder %s1683, 7
      %s1687 = scalar_select %p1686, %s1683, 7
      %s1688 = smul.addr %s1685, 8
      %s1689 = sadd.s32 %s1687, %s1688
      %s1690 = smul.addr %s1689, 8
      %s1691 = scalar_lea.vmem %s17, %s1690
      // Predicated region
      $region105: #{tpu_custom_call.1} parent=87 // pred_check
        %p1692 = pneg %p431
      $region106: #{tpu_custom_call.1} parent=87 // pred_check_branch
        %1694 = sbr.rel (%p1692) target = $region108
      $region107: #{tpu_custom_call.1} parent=87 // pred_region
        %s1695 = smul.u32 4, %s35
      $region108: #{tpu_custom_call.1} parent=87 // pred_fallthru
        _
    $region88: #{tpu_custom_call.1} parent=5 // pred_fallthru
      _
    %p1696 = scmp.le.s32.totalorder 2, %s23
    // Predicated region
    $region109: #{tpu_custom_call.1} parent=5 // pred_check
      %p1697 = pneg %p1696
    $region110: #{tpu_custom_call.1} parent=5 // pred_check_branch
      %1699 = sbr.rel (%p1697) target = $region112
    $region111: #{tpu_custom_call.1} parent=5 // pred_region
      %s1700 = ssub.s32 %s23, 2
      // Predicated region
      $region113: #{tpu_custom_call.1} parent=111 // pred_check
        %p1701 = pneg %p437
      $region114: #{tpu_custom_call.1} parent=111 // pred_check_branch
        %1703 = sbr.rel (%p1701) target = $region116
      $region115: #{tpu_custom_call.1} parent=111 // pred_region
        %s1704 = smul.u32 4, %s38
        %p1705 = scmp.lt.s32.totalorder %s36, 1
        %s1706 = scalar_select %p1705, %s36, 1
        %p1707 = scmp.lt.s32.totalorder %s1704, 7
        %s1708 = scalar_select %p1707, %s1704, 7
        %s1709 = smul.addr %s1706, 8
        %s1710 = sadd.s32 %s1708, %s1709
        %s1711 = smul.addr %s1710, 8
        %s1712 = scalar_lea.vmem %s17, %s1711
      $region116: #{tpu_custom_call.1} parent=111 // pred_fallthru
        _
    $region112: #{tpu_custom_call.1} parent=5 // pred_fallthru
      _
  $region6: #{tpu_custom_call.1} parent=0 // loop_footer
    %s27 = sadd.s32 1, %s23
  $region7: #{tpu_custom_call.1} parent=0 // loop_footer_branch
    %22 = sbr.rel target = $region3
  $region8: #{tpu_custom_call.1} parent=0 // loop_exit
    _

</llo_original>
